<compile_context>
chip_gen: v7x
topology: tpu7x:2x2x1
jax: 0.10.0
libtpu: 0.0.40
codegen_flags: <defaults>
</compile_context>

<pallas_src>
import math

import jax
import jax.numpy as jnp
from jax import lax
from jax.experimental import pallas as pl
from jax.experimental.pallas import tpu as pltpu

# ---- TransformerConfig (synthetic, deterministic) ----
D_MODEL = 32
N_HEADS = 4
D_HEAD = D_MODEL // N_HEADS
D_MLP = 4 * D_MODEL
LN_EPS = 1e-5
INIT_RANGE = 0.02
NEG_INF = -1e30            # large finite negative (exp underflows to exactly 0)
QKV_PAD = 128              # 3*D_MODEL=96 zero-padded to one lane tile
PER_HEAD_W = 3 * D_HEAD    # 24 = q|k|v block per head in the permuted layout


def _layernorm(t, w, b):
    # Matches the PyTorch module exactly: divides by (std + eps),
    # i.e. var(unbiased=False).sqrt() + eps.
    mean = jnp.mean(t, axis=-1, keepdims=True)
    std = jnp.sqrt(jnp.mean((t - mean) ** 2, axis=-1, keepdims=True))
    return w * ((t - mean) / (std + LN_EPS)) + b


def _make_block_kernel(B, S):
    inv_sqrt_dh = 1.0 / math.sqrt(D_HEAD)

    def kernel(x_ref, wslab_ref, wout_ref, vslab_ref, o_ref):
        x = x_ref[...].astype(jnp.float32)                        # (B*S, D)

        # -------- unpack packed parameter slabs (static, aligned ref slices) --------
        ln1w = vslab_ref[0:1, 0:D_MODEL]
        ln1b = vslab_ref[1:2, 0:D_MODEL]
        ln2w = vslab_ref[2:3, 0:D_MODEL]
        ln2b = vslab_ref[3:4, 0:D_MODEL]
        battn = vslab_ref[4:5, :]                                 # (1,128), cols 96:128 = 0
        b_in = vslab_ref[5:6, :]                                  # (1,128)
        bo = vslab_ref[6:7, 0:D_MODEL]
        bout = vslab_ref[7:8, 0:D_MODEL]

        wattn = wslab_ref[:, 0:QKV_PAD]                           # (32,128), cols 96:128 = 0
        w_in = wslab_ref[:, QKV_PAD:QKV_PAD + D_MLP]              # (32,128)
        wo = wslab_ref[:, QKV_PAD + D_MLP:QKV_PAD + D_MLP + D_MODEL]  # (32,32)

        # -------- LN1 + fused QKV projection (one lane-dense GEMM) --------
        x1 = _layernorm(x, ln1w, ln1b)
        qkv = jnp.dot(x1, wattn, preferred_element_type=jnp.float32) + battn  # (B*S, 128)
        qkv3 = qkv.reshape(B, S, QKV_PAD)                         # split rows only

        # Head stacking: W_attn columns were pre-permuted head-major in the wrapper,
        # so each head is ONE contiguous width-24 (q|k|v) lane slice.
        stacked = jnp.concatenate(
            [qkv3[:, :, h * PER_HEAD_W:(h + 1) * PER_HEAD_W] for h in range(N_HEADS)],
            axis=0)                                               # (H*B, S, 24)
        qs = stacked[:, :, 0:D_HEAD]
        ks = stacked[:, :, D_HEAD:2 * D_HEAD]
        vs = stacked[:, :, 2 * D_HEAD:3 * D_HEAD]

        # Additive causal mask built in-kernel (saves an input DMA; a few VPU ops).
        rows = lax.broadcasted_iota(jnp.int32, (S, S), 0)
        cols = lax.broadcasted_iota(jnp.int32, (S, S), 1)
        causal = jnp.where(cols > rows, NEG_INF, 0.0)

        # -------- attention: all (batch, head) pairs batched in one einsum --------
        scores = jnp.einsum('bqd,bkd->bqk', qs, ks,
                            preferred_element_type=jnp.float32) * inv_sqrt_dh
        scores = scores + causal[None]
        scores = scores - jnp.max(scores, axis=-1, keepdims=True)  # kept: arbitrary inputs
        p = jnp.exp(scores)
        p = p * pl.reciprocal(jnp.sum(p, axis=-1, keepdims=True), approx=True)
        o_heads = jnp.einsum('bqk,bkd->bqd', p, vs,
                             preferred_element_type=jnp.float32)   # (H*B, S, d_head)

        # regroup heads -> (B*S, D) and apply W_O with ONE GEMM
        attn = jnp.concatenate(
            [o_heads[h * B:(h + 1) * B] for h in range(N_HEADS)], axis=-1)  # (B, S, D)
        attn = attn.reshape(B * S, D_MODEL)
        attn = jnp.dot(attn, wo, preferred_element_type=jnp.float32) + bo
        inter = attn + x                                          # first residual

        # -------- LN2 + MLP --------
        x2 = _layernorm(inter, ln2w, ln2b)
        hpre = jnp.dot(x2, w_in, preferred_element_type=jnp.float32) + b_in
        # exact GELU (PyTorch nn.GELU default, erf-based) -- kept for semantics fidelity
        hact = 0.5 * hpre * (1.0 + lax.erf(hpre * (1.0 / math.sqrt(2.0))))
        mlp = jnp.dot(hact, wout_ref[...], preferred_element_type=jnp.float32) + bout

        # TODO(synk): at larger B*S, present the output as a lane-dense
        # (B*S*D//128, 128) slab; the needed sublane->lane relayout is skipped here
        # (2 KB output, reshape lowering risk outweighs the benefit at this size).
        o_ref[...] = (mlp + inter).astype(o_ref.dtype)            # second residual

    return kernel


def _pack_params(params):
    """Pack the 12 parameter arrays into 3 lane-dense slabs (done once, at trace time)."""
    (ln1w, ln1b, wattn, battn, wo, bo, ln2w, ln2b, win, bin_, wout, bout) = params

    # Head-major column permutation of W_attn / b_attn: per head h, columns
    # [q_h | k_h | v_h] become one contiguous width-24 block.
    perm = []
    for h in range(N_HEADS):
        for base in (0, D_MODEL, 2 * D_MODEL):
            perm += list(range(base + h * D_HEAD, base + (h + 1) * D_HEAD))
    perm = jnp.asarray(perm, jnp.int32)
    wattn_p = wattn[:, perm]
    battn_p = battn[:, perm]

    wattn_pad = jnp.pad(wattn_p, ((0, 0), (0, QKV_PAD - 3 * D_MODEL)))   # (32,128)
    w_slab = jnp.concatenate([wattn_pad, win, wo], axis=1).astype(jnp.float32)  # (32,288)

    def row(v):
        v = v.reshape(1, -1).astype(jnp.float32)
        return jnp.pad(v, ((0, 0), (0, 128 - v.shape[1])))

    vec_slab = jnp.concatenate(
        [row(ln1w), row(ln1b), row(ln2w), row(ln2b),
         row(battn_p), row(bin_), row(bo), row(bout)], axis=0)           # (8,128)

    return w_slab, wout.astype(jnp.float32), vec_slab


def transformer_block(x, params):
    # TODO(synk): optional `attention_mask` argument not implemented (defaults to None in PyTorch).
    B, S, D = x.shape
    x2d = x.reshape(B * S, D)                         # fold batch into the GEMM M dim
    w_slab, w_out, vec_slab = _pack_params(params)

    vmem = pl.BlockSpec(memory_space=pltpu.MemorySpace.VMEM)  # whole-array, no pipelining

    out2d = pl.pallas_call(
        _make_block_kernel(B, S),
        out_shape=jax.ShapeDtypeStruct((B * S, D), x.dtype),
        in_specs=[vmem, vmem, vmem, vmem],
        out_specs=vmem,
    )(x2d, w_slab, w_out, vec_slab)
    return out2d.reshape(B, S, D)


def transformer_block_ref(x, params):
    """Pure-JAX reference for correctness checking."""
    (ln1w, ln1b, wattn, battn, wo, bo, ln2w, ln2b, win, bin_, wout, bout) = params

    def ln(t, w, b):
        mean = jnp.mean(t, axis=-1, keepdims=True)
        std = jnp.sqrt(jnp.mean((t - mean) ** 2, axis=-1, keepdims=True))
        return w * ((t - mean) / (std + LN_EPS)) + b

    B, S, D = x.shape
    x1 = ln(x, ln1w, ln1b)
    qkv = x1 @ wattn + battn
    q, k, v = jnp.split(qkv, 3, axis=-1)
    q = q.reshape(B, S, N_HEADS, D_HEAD).transpose(0, 2, 1, 3)
    k = k.reshape(B, S, N_HEADS, D_HEAD).transpose(0, 2, 1, 3)
    v = v.reshape(B, S, N_HEADS, D_HEAD).transpose(0, 2, 1, 3)
    scores = jnp.einsum('bhqd,bhkd->bhqk', q, k) / math.sqrt(D_HEAD)
    mask = jnp.triu(jnp.ones((S, S), bool), k=1)
    scores = jnp.where(mask, -jnp.inf, scores)
    p = jax.nn.softmax(scores, axis=-1)
    o = jnp.einsum('bhqk,bhkd->bhqd', p, v).transpose(0, 2, 1, 3).reshape(B, S, D)
    inter = o @ wo + bo + x
    x2 = ln(inter, ln2w, ln2b)
    h = x2 @ win + bin_
    h = 0.5 * h * (1.0 + lax.erf(h / math.sqrt(2.0)))
    return h @ wout + bout + inter


if __name__ == "__main__":
    B, S = 2, 8
    key = jax.random.PRNGKey(0)
    keys = jax.random.split(key, 8)

    x = jax.random.normal(keys[0], (B, S, D_MODEL), jnp.float32)

    # Deterministic parameter init (shapes from the module's __init__).
    ln1w = jnp.ones((1, D_MODEL), jnp.float32)
    ln1b = jnp.zeros((1, D_MODEL), jnp.float32)
    ln2w = jnp.ones((1, D_MODEL), jnp.float32)
    ln2b = jnp.zeros((1, D_MODEL), jnp.float32)
    # nn.Linear weights are (out, in) in PyTorch; stored pre-transposed (in, out).
    wattn = INIT_RANGE * jax.random.normal(keys[1], (D_MODEL, 3 * D_MODEL), jnp.float32)
    battn = 0.01 * jax.random.normal(keys[2], (1, 3 * D_MODEL), jnp.float32)
    wo = INIT_RANGE * jax.random.normal(keys[3], (D_MODEL, D_MODEL), jnp.float32)
    bo = 0.01 * jax.random.normal(keys[4], (1, D_MODEL), jnp.float32)
    win = 0.1 * jax.random.normal(keys[5], (D_MODEL, D_MLP), jnp.float32)
    bin_ = 0.01 * jax.random.normal(keys[6], (1, D_MLP), jnp.float32)
    wout = 0.1 * jax.random.normal(keys[7], (D_MLP, D_MODEL), jnp.float32)
    bout = jnp.zeros((1, D_MODEL), jnp.float32)

    params = (ln1w, ln1b, wattn, battn, wo, bo, ln2w, ln2b, win, bin_, wout, bout)

    out = transformer_block(x, params)
    jax.block_until_ready(out)

    ref = transformer_block_ref(x, params)
    assert out.shape == (B, S, D_MODEL)
    assert jnp.allclose(out, ref, rtol=1e-2, atol=1e-2), "mismatch vs JAX reference"

    print("KERNEL_OK")
</pallas_src>

<mosaic_0001>
module attributes {stable_mosaic.version = 11 : i64} {
  func.func @kernel(%arg0: memref<16x32xf32, #tpu.memory_space<vmem>>, %arg1: memref<32x288xf32, #tpu.memory_space<vmem>>, %arg2: memref<128x32xf32, #tpu.memory_space<vmem>>, %arg3: memref<8x128xf32, #tpu.memory_space<vmem>>, %arg4: memref<16x32xf32, #tpu.memory_space<vmem>>) attributes {dimension_semantics = [], scalar_prefetch = 0 : i64, scratch_operands = 0 : i64, tpu.core_type = #tpu.core_type<tc>} {
    %c0 = arith.constant 0 : index
    %c0_0 = arith.constant 0 : index
    %0 = vector.load %arg0[%c0, %c0_0] : memref<16x32xf32, #tpu.memory_space<vmem>>, vector<16x32xf32>
    %c0_1 = arith.constant 0 : index
    %c0_2 = arith.constant 0 : index
    %1 = vector.load %arg3[%c0_1, %c0_2] : memref<8x128xf32, #tpu.memory_space<vmem>>, vector<1x32xf32>
    %c1 = arith.constant 1 : index
    %c0_3 = arith.constant 0 : index
    %2 = vector.load %arg3[%c1, %c0_3] : memref<8x128xf32, #tpu.memory_space<vmem>>, vector<1x32xf32>
    %c2 = arith.constant 2 : index
    %c0_4 = arith.constant 0 : index
    %3 = vector.load %arg3[%c2, %c0_4] : memref<8x128xf32, #tpu.memory_space<vmem>>, vector<1x32xf32>
    %c3 = arith.constant 3 : index
    %c0_5 = arith.constant 0 : index
    %4 = vector.load %arg3[%c3, %c0_5] : memref<8x128xf32, #tpu.memory_space<vmem>>, vector<1x32xf32>
    %c4 = arith.constant 4 : index
    %c0_6 = arith.constant 0 : index
    %5 = vector.load %arg3[%c4, %c0_6] : memref<8x128xf32, #tpu.memory_space<vmem>>, vector<1x128xf32>
    %c5 = arith.constant 5 : index
    %c0_7 = arith.constant 0 : index
    %6 = vector.load %arg3[%c5, %c0_7] : memref<8x128xf32, #tpu.memory_space<vmem>>, vector<1x128xf32>
    %c6 = arith.constant 6 : index
    %c0_8 = arith.constant 0 : index
    %7 = vector.load %arg3[%c6, %c0_8] : memref<8x128xf32, #tpu.memory_space<vmem>>, vector<1x32xf32>
    %c7 = arith.constant 7 : index
    %c0_9 = arith.constant 0 : index
    %8 = vector.load %arg3[%c7, %c0_9] : memref<8x128xf32, #tpu.memory_space<vmem>>, vector<1x32xf32>
    %c0_10 = arith.constant 0 : index
    %c0_11 = arith.constant 0 : index
    %9 = vector.load %arg1[%c0_10, %c0_11] : memref<32x288xf32, #tpu.memory_space<vmem>>, vector<32x128xf32>
    %c0_12 = arith.constant 0 : index
    %c128 = arith.constant 128 : index
    %10 = vector.load %arg1[%c0_12, %c128] : memref<32x288xf32, #tpu.memory_space<vmem>>, vector<32x128xf32>
    %c0_13 = arith.constant 0 : index
    %c256 = arith.constant 256 : index
    %11 = vector.load %arg1[%c0_13, %c256] : memref<32x288xf32, #tpu.memory_space<vmem>>, vector<32x32xf32>
    %cst = arith.constant dense<0.000000e+00> : vector<16xf32>
    %12 = vector.multi_reduction <add>, %0, %cst [1] : vector<16x32xf32> to vector<16xf32>
    %13 = vector.shape_cast %12 : vector<16xf32> to vector<16x1xf32>
    %cst_14 = arith.constant 3.200000e+01 : f32
    %14 = vector.broadcast %cst_14 : f32 to vector<16x1xf32>
    %15 = arith.divf %13, %14 : vector<16x1xf32>
    %16 = vector.broadcast %15 : vector<16x1xf32> to vector<16x32xf32>
    %17 = arith.subf %0, %16 : vector<16x32xf32>
    %18 = arith.mulf %17, %17 : vector<16x32xf32>
    %cst_15 = arith.constant dense<0.000000e+00> : vector<16xf32>
    %19 = vector.multi_reduction <add>, %18, %cst_15 [1] : vector<16x32xf32> to vector<16xf32>
    %20 = vector.shape_cast %19 : vector<16xf32> to vector<16x1xf32>
    %cst_16 = arith.constant 3.200000e+01 : f32
    %21 = vector.broadcast %cst_16 : f32 to vector<16x1xf32>
    %22 = arith.divf %20, %21 : vector<16x1xf32>
    %23 = math.sqrt %22 : vector<16x1xf32>
    %24 = vector.broadcast %15 : vector<16x1xf32> to vector<16x32xf32>
    %25 = arith.subf %0, %24 : vector<16x32xf32>
    %cst_17 = arith.constant 9.99999974E-6 : f32
    %26 = vector.broadcast %cst_17 : f32 to vector<16x1xf32>
    %27 = arith.addf %23, %26 : vector<16x1xf32>
    %28 = vector.broadcast %27 : vector<16x1xf32> to vector<16x32xf32>
    %29 = arith.divf %25, %28 : vector<16x32xf32>
    %30 = vector.broadcast %1 : vector<1x32xf32> to vector<16x32xf32>
    %31 = arith.mulf %30, %29 : vector<16x32xf32>
    %32 = vector.broadcast %2 : vector<1x32xf32> to vector<16x32xf32>
    %33 = arith.addf %31, %32 : vector<16x32xf32>
    %cst_18 = arith.constant dense<0.000000e+00> : vector<16x128xf32>
    %34 = tpu.matmul %33, %9, %cst_18 {dimension_numbers = #tpu.dot_dimension_numbers<[1], [0], [0], [1], [0, 0, 1, 1], [], []>} : vector<16x32xf32>, vector<32x128xf32>, vector<16x128xf32> -> vector<16x128xf32>
    %35 = vector.broadcast %5 : vector<1x128xf32> to vector<16x128xf32>
    %36 = arith.addf %34, %35 : vector<16x128xf32>
    %37 = vector.shape_cast %36 : vector<16x128xf32> to vector<2x8x128xf32>
    %38 = vector.extract_strided_slice %37 {offsets = [0, 0, 0], sizes = [2, 8, 24], strides = [1, 1, 1]} : vector<2x8x128xf32> to vector<2x8x24xf32>
    %39 = vector.extract_strided_slice %37 {offsets = [0, 0, 24], sizes = [2, 8, 24], strides = [1, 1, 1]} : vector<2x8x128xf32> to vector<2x8x24xf32>
    %40 = vector.extract_strided_slice %37 {offsets = [0, 0, 48], sizes = [2, 8, 24], strides = [1, 1, 1]} : vector<2x8x128xf32> to vector<2x8x24xf32>
    %41 = vector.extract_strided_slice %37 {offsets = [0, 0, 72], sizes = [2, 8, 24], strides = [1, 1, 1]} : vector<2x8x128xf32> to vector<2x8x24xf32>
    %42 = tpu.concatenate %38, %39, %40, %41 in 0 : vector<2x8x24xf32>, vector<2x8x24xf32>, vector<2x8x24xf32>, vector<2x8x24xf32> -> vector<8x8x24xf32>
    %43 = vector.extract_strided_slice %42 {offsets = [0, 0, 0], sizes = [8, 8, 8], strides = [1, 1, 1]} : vector<8x8x24xf32> to vector<8x8x8xf32>
    %44 = vector.extract_strided_slice %42 {offsets = [0, 0, 8], sizes = [8, 8, 8], strides = [1, 1, 1]} : vector<8x8x24xf32> to vector<8x8x8xf32>
    %45 = vector.extract_strided_slice %42 {offsets = [0, 0, 16], sizes = [8, 8, 8], strides = [1, 1, 1]} : vector<8x8x24xf32> to vector<8x8x8xf32>
    %46 = tpu.iota {dimensions = array<i32: 0>} : vector<8x8xi32>
    %47 = tpu.iota {dimensions = array<i32: 1>} : vector<8x8xi32>
    %48 = arith.cmpi sgt, %47, %46 : vector<8x8xi32>
    %cst_19 = arith.constant -1.000000e+30 : f32
    %cst_20 = arith.constant 0.000000e+00 : f32
    %49 = vector.broadcast %cst_19 : f32 to vector<8x8xf32>
    %50 = vector.broadcast %cst_20 : f32 to vector<8x8xf32>
    %51 = arith.select %48, %49, %50 : vector<8x8xi1>, vector<8x8xf32>
    "tpu.trace_start"() <{level = 10 : i32, message = "bqd,bkd->bqk"}> : () -> ()
    %cst_21 = arith.constant dense<0.000000e+00> : vector<8x8x8xf32>
    %52 = tpu.matmul %43, %44, %cst_21 {dimension_numbers = #tpu.dot_dimension_numbers<[2], [2], [1], [1], [0, 0, 0, 1, 1, 1], [0], [0]>} : vector<8x8x8xf32>, vector<8x8x8xf32>, vector<8x8x8xf32> -> vector<8x8x8xf32>
    "tpu.trace_stop"() : () -> ()
    %cst_22 = arith.constant 0.353553385 : f32
    %53 = vector.broadcast %cst_22 : f32 to vector<8x8x8xf32>
    %54 = arith.mulf %52, %53 : vector<8x8x8xf32>
    %55 = vector.shape_cast %51 : vector<8x8xf32> to vector<1x8x8xf32>
    %56 = vector.broadcast %55 : vector<1x8x8xf32> to vector<8x8x8xf32>
    %57 = arith.addf %54, %56 : vector<8x8x8xf32>
    %cst_23 = arith.constant dense<0xFF800000> : vector<8x8xf32>
    %58 = vector.multi_reduction <maximumf>, %57, %cst_23 [2] : vector<8x8x8xf32> to vector<8x8xf32>
    %59 = vector.shape_cast %58 : vector<8x8xf32> to vector<8x8x1xf32>
    %60 = vector.broadcast %59 : vector<8x8x1xf32> to vector<8x8x8xf32>
    %61 = arith.subf %57, %60 : vector<8x8x8xf32>
    %62 = math.exp %61 : vector<8x8x8xf32>
    %cst_24 = arith.constant dense<0.000000e+00> : vector<8x8xf32>
    %63 = vector.multi_reduction <add>, %62, %cst_24 [2] : vector<8x8x8xf32> to vector<8x8xf32>
    %64 = vector.shape_cast %63 : vector<8x8xf32> to vector<8x8x1xf32>
    %65 = tpu.reciprocal %64 {approx = true} : vector<8x8x1xf32> -> vector<8x8x1xf32>
    %66 = vector.broadcast %65 : vector<8x8x1xf32> to vector<8x8x8xf32>
    %67 = arith.mulf %62, %66 : vector<8x8x8xf32>
    "tpu.trace_start"() <{level = 10 : i32, message = "bqk,bkd->bqd"}> : () -> ()
    %cst_25 = arith.constant dense<0.000000e+00> : vector<8x8x8xf32>
    %68 = tpu.matmul %67, %45, %cst_25 {dimension_numbers = #tpu.dot_dimension_numbers<[2], [1], [1], [2], [0, 0, 0, 1, 1, 2], [0], [0]>} : vector<8x8x8xf32>, vector<8x8x8xf32>, vector<8x8x8xf32> -> vector<8x8x8xf32>
    "tpu.trace_stop"() : () -> ()
    %69 = vector.extract_strided_slice %68 {offsets = [0, 0, 0], sizes = [2, 8, 8], strides = [1, 1, 1]} : vector<8x8x8xf32> to vector<2x8x8xf32>
    %70 = vector.extract_strided_slice %68 {offsets = [2, 0, 0], sizes = [2, 8, 8], strides = [1, 1, 1]} : vector<8x8x8xf32> to vector<2x8x8xf32>
    %71 = vector.extract_strided_slice %68 {offsets = [4, 0, 0], sizes = [2, 8, 8], strides = [1, 1, 1]} : vector<8x8x8xf32> to vector<2x8x8xf32>
    %72 = vector.extract_strided_slice %68 {offsets = [6, 0, 0], sizes = [2, 8, 8], strides = [1, 1, 1]} : vector<8x8x8xf32> to vector<2x8x8xf32>
    %73 = tpu.concatenate %69, %70, %71, %72 in 2 : vector<2x8x8xf32>, vector<2x8x8xf32>, vector<2x8x8xf32>, vector<2x8x8xf32> -> vector<2x8x32xf32>
    %74 = vector.shape_cast %73 : vector<2x8x32xf32> to vector<16x32xf32>
    %cst_26 = arith.constant dense<0.000000e+00> : vector<16x32xf32>
    %75 = tpu.matmul %74, %11, %cst_26 {dimension_numbers = #tpu.dot_dimension_numbers<[1], [0], [0], [1], [0, 0, 1, 1], [], []>} : vector<16x32xf32>, vector<32x32xf32>, vector<16x32xf32> -> vector<16x32xf32>
    %76 = vector.broadcast %7 : vector<1x32xf32> to vector<16x32xf32>
    %77 = arith.addf %75, %76 : vector<16x32xf32>
    %78 = arith.addf %77, %0 : vector<16x32xf32>
    %cst_27 = arith.constant dense<0.000000e+00> : vector<16xf32>
    %79 = vector.multi_reduction <add>, %78, %cst_27 [1] : vector<16x32xf32> to vector<16xf32>
    %80 = vector.shape_cast %79 : vector<16xf32> to vector<16x1xf32>
    %cst_28 = arith.constant 3.200000e+01 : f32
    %81 = vector.broadcast %cst_28 : f32 to vector<16x1xf32>
    %82 = arith.divf %80, %81 : vector<16x1xf32>
    %83 = vector.broadcast %82 : vector<16x1xf32> to vector<16x32xf32>
    %84 = arith.subf %78, %83 : vector<16x32xf32>
    %85 = arith.mulf %84, %84 : vector<16x32xf32>
    %cst_29 = arith.constant dense<0.000000e+00> : vector<16xf32>
    %86 = vector.multi_reduction <add>, %85, %cst_29 [1] : vector<16x32xf32> to vector<16xf32>
    %87 = vector.shape_cast %86 : vector<16xf32> to vector<16x1xf32>
    %cst_30 = arith.constant 3.200000e+01 : f32
    %88 = vector.broadcast %cst_30 : f32 to vector<16x1xf32>
    %89 = arith.divf %87, %88 : vector<16x1xf32>
    %90 = math.sqrt %89 : vector<16x1xf32>
    %91 = vector.broadcast %82 : vector<16x1xf32> to vector<16x32xf32>
    %92 = arith.subf %78, %91 : vector<16x32xf32>
    %cst_31 = arith.constant 9.99999974E-6 : f32
    %93 = vector.broadcast %cst_31 : f32 to vector<16x1xf32>
    %94 = arith.addf %90, %93 : vector<16x1xf32>
    %95 = vector.broadcast %94 : vector<16x1xf32> to vector<16x32xf32>
    %96 = arith.divf %92, %95 : vector<16x32xf32>
    %97 = vector.broadcast %3 : vector<1x32xf32> to vector<16x32xf32>
    %98 = arith.mulf %97, %96 : vector<16x32xf32>
    %99 = vector.broadcast %4 : vector<1x32xf32> to vector<16x32xf32>
    %100 = arith.addf %98, %99 : vector<16x32xf32>
    %cst_32 = arith.constant dense<0.000000e+00> : vector<16x128xf32>
    %101 = tpu.matmul %100, %10, %cst_32 {dimension_numbers = #tpu.dot_dimension_numbers<[1], [0], [0], [1], [0, 0, 1, 1], [], []>} : vector<16x32xf32>, vector<32x128xf32>, vector<16x128xf32> -> vector<16x128xf32>
    %102 = vector.broadcast %6 : vector<1x128xf32> to vector<16x128xf32>
    %103 = arith.addf %101, %102 : vector<16x128xf32>
    %cst_33 = arith.constant 5.000000e-01 : f32
    %104 = vector.broadcast %cst_33 : f32 to vector<16x128xf32>
    %105 = arith.mulf %104, %103 : vector<16x128xf32>
    %cst_34 = arith.constant 0.707106769 : f32
    %106 = vector.broadcast %cst_34 : f32 to vector<16x128xf32>
    %107 = arith.mulf %103, %106 : vector<16x128xf32>
    %108 = math.erf %107 : vector<16x128xf32>
    %cst_35 = arith.constant 1.000000e+00 : f32
    %109 = vector.broadcast %cst_35 : f32 to vector<16x128xf32>
    %110 = arith.addf %109, %108 : vector<16x128xf32>
    %111 = arith.mulf %105, %110 : vector<16x128xf32>
    %c0_36 = arith.constant 0 : index
    %c0_37 = arith.constant 0 : index
    %112 = vector.load %arg2[%c0_36, %c0_37] : memref<128x32xf32, #tpu.memory_space<vmem>>, vector<128x32xf32>
    %cst_38 = arith.constant dense<0.000000e+00> : vector<16x32xf32>
    %113 = tpu.matmul %111, %112, %cst_38 {dimension_numbers = #tpu.dot_dimension_numbers<[1], [0], [0], [1], [0, 0, 1, 1], [], []>} : vector<16x128xf32>, vector<128x32xf32>, vector<16x32xf32> -> vector<16x32xf32>
    %114 = vector.broadcast %8 : vector<1x32xf32> to vector<16x32xf32>
    %115 = arith.addf %113, %114 : vector<16x32xf32>
    %116 = arith.addf %115, %78 : vector<16x32xf32>
    %c0_39 = arith.constant 0 : index
    %c0_40 = arith.constant 0 : index
    %117 = vector.load %arg4[%c0_39, %c0_40] : memref<16x32xf32, #tpu.memory_space<vmem>>, vector<16x32xf32>
    tpu.vector_store %arg4[%c0_39, %c0_40], %116 {strides = array<i32>} : memref<16x32xf32, #tpu.memory_space<vmem>>, vector<16x32xf32>,
    return
  }
}

</mosaic_0001>

<llo_original>
// kernel: tpu_custom_call.1
$region0: #{tpu_custom_call.1}
  #allocation0 [shape = 'u32[]', space=smem, size = 0x4, offset = 0x4, fixed_abs, tag = 'smem constant byte address 0x4 - core index']
  #allocation1 [shape = 'u32[144,128]{1,0:T(1,128)}', space=vmem, size = 0x12000, scoped, tag = 'internal scratch']
  %s0 = inlined_call_operand.vmem [shape: f32[16,32], index: 0, kind: input, shape index: {}]
  %s1 = inlined_call_operand.vmem [shape: f32[32,288], index: 1, kind: input, shape index: {}]
  %s2 = inlined_call_operand.vmem [shape: f32[128,32], index: 2, kind: input, shape index: {}]
  %s3 = inlined_call_operand.vmem [shape: f32[8,128], index: 3, kind: input, shape index: {}]
  %s4 = inlined_call_operand.hbm [shape: f32[16,32], index: 4, kind: output, shape index: {}]
  %s5 = sld [smem:[#allocation0]]
  $region26: #{tpu_custom_call.1} parent=0
    _
  %s7 = ssub.s32 1, %s5
  %s8 = scalar_select 0, %s7, %s5
  $region1: #{tpu_custom_call.1} parent=0
    #allocation2 [shape = 'u8[8192]{0}', space=vmem, size = 0x2000, scoped, tag = 'output window, operand 0, single buffered']
    #allocation3 [shape = 's32[1]{0}', space=sflag, size = 0x4, scoped, tag = 'scoped memory for tpu_custom_call.1']
    %9 = vsyncpa [#allocation3], 0
    // Predicated region
    $region2: #{tpu_custom_call.1} parent=1 // pred_check
      _
    $region3: #{tpu_custom_call.1} parent=1 // pred_check_branch
      %11 = sbr.rel (0) target = $region5
    $region4: #{tpu_custom_call.1} parent=1 // pred_region
      _
    $region5: #{tpu_custom_call.1} parent=1 // pred_fallthru
      _
    // Predicated region
    $region6: #{tpu_custom_call.1} parent=1 // pred_check
      _
    $region7: #{tpu_custom_call.1} parent=1 // pred_check_branch
      %13 = sbr.rel (0) target = $region9
    $region8: #{tpu_custom_call.1} parent=1 // pred_region
      _
    $region9: #{tpu_custom_call.1} parent=1 // pred_fallthru
      _
    // Predicated region
    $region10: #{tpu_custom_call.1} parent=1 // pred_check
      _
    $region11: #{tpu_custom_call.1} parent=1 // pred_check_branch
      %15 = sbr.rel (0) target = $region13
    $region12: #{tpu_custom_call.1} parent=1 // pred_region
      _
    $region13: #{tpu_custom_call.1} parent=1 // pred_fallthru
      _
    // Predicated region
    $region14: #{tpu_custom_call.1} parent=1 // pred_check
      _
    $region15: #{tpu_custom_call.1} parent=1 // pred_check_branch
      %17 = sbr.rel (0) target = $region17
    $region16: #{tpu_custom_call.1} parent=1 // pred_region
      _
    $region17: #{tpu_custom_call.1} parent=1 // pred_fallthru
      _
    %v18 = vld [vmem:[%s0] sm:$0xff]
    %v19 = vld [vmem:[%s0 + $0x8] sm:$0xff]
    %v20 = vld [vmem:[%s3] sm:$0x1]
    %v21 = vld [vmem:[%s3 + $0x1] sm:$0x1]
    %v22 = vld [vmem:[%s3 + $0x2] sm:$0x1]
    %v23 = vld [vmem:[%s3 + $0x3] sm:$0x1]
    %v24 = vld [vmem:[%s3 + $0x4] sm:$0x1]
    %v25 = vld [vmem:[%s3 + $0x5] sm:$0x1]
    %v26 = vld [vmem:[%s3 + $0x6] sm:$0x1]
    %v27 = vld [vmem:[%s3 + $0x7] sm:$0x1]
    %v28 = vld [vmem:[%s1] sm:$0xff]
    %v29 = vld [vmem:[%s1 + $0x18] sm:$0xff]
    %v30 = vld [vmem:[%s1 + $0x30] sm:$0xff]
    %v31 = vld [vmem:[%s1 + $0x48] sm:$0xff]
    %v32 = vld [vmem:[%s1 + $0x8] sm:$0xff]
    %v33 = vld [vmem:[%s1 + $0x20] sm:$0xff]
    %v34 = vld [vmem:[%s1 + $0x38] sm:$0xff]
    %v35 = vld [vmem:[%s1 + $0x50] sm:$0xff]
    %v36 = vld [vmem:[%s1 + $0x10] sm:$0xff]
    %v37 = vld [vmem:[%s1 + $0x28] sm:$0xff]
    %v38 = vld [vmem:[%s1 + $0x40] sm:$0xff]
    %v39 = vld [vmem:[%s1 + $0x58] sm:$0xff]
    %vm40 = vcmask 261120
    %v41 = vsel %vm40, %v18, 0.0
    %42 = vadd.xlane.f32.xlu0 %v41
    %v43 = vpop.xlane.xlu0 %42
    %v44 = vsel %vm40, %v19, 0.0
    %45 = vadd.xlane.f32.xlu0 %v44
    %v46 = vpop.xlane.xlu0 %45
    %v47 = vrcp.pop 32.0
    %v48 = vmul.f32 %v43, %v47
    %v49 = vmul.f32 %v46, %v47
    %v50 = vsub.f32 %v18, %v48
    %v51 = vsub.f32 %v19, %v49
    %v52 = vmul.f32 %v50, %v50
    %v53 = vmul.f32 %v51, %v51
    %v54 = vsel %vm40, %v52, 0.0
    %55 = vadd.xlane.f32.xlu0 %v54
    %v56 = vpop.xlane.xlu0 %55
    %v57 = vsel %vm40, %v53, 0.0
    %58 = vadd.xlane.f32.xlu0 %v57
    %v59 = vpop.xlane.xlu0 %58
    %v60 = vmul.f32 %v56, %v47
    %v61 = vmul.f32 %v59, %v47
    %v62 = vrsqrt.pop %v60
    %v63 = vmul.f32 %v60, %v62
    %vm64 = vcmp.eq.f32.partialorder %v60, inf
    %v65 = vsel %vm64, %v60, %v63
    %vm66 = vcmp.eq.f32.partialorder %v60, 0.0
    %v67 = vand.u32 %v60, 2147483648
    %v68 = vsel %vm66, %v67, %v65
    %v69 = vrsqrt.pop %v61
    %v70 = vmul.f32 %v61, %v69
    %vm71 = vcmp.eq.f32.partialorder %v61, inf
    %v72 = vsel %vm71, %v61, %v70
    %vm73 = vcmp.eq.f32.partialorder %v61, 0.0
    %v74 = vand.u32 %v61, 2147483648
    %v75 = vsel %vm73, %v74, %v72
    %v76 = vadd.f32 %v68, 1e-05
    %v77 = vadd.f32 %v75, 1e-05
    %v78 = vrcp.pop %v76
    %v79 = vmul.f32 %v50, %v78
    %v80 = vrcp.pop %v77
    %v81 = vmul.f32 %v51, %v80
    %v82 = vlaneseq
    %v83 = vshrl.u32 %v82, 7
    %v84 = vsub.s32 0, %v83
    %v85 = vrot.slane %v20, %v84
    %v86 = vmul.f32 %v85, %v79
    %v87 = vmul.f32 %v85, %v81
    %v88 = vlaneseq
    %v89 = vshrl.u32 %v88, 7
    %v90 = vsub.s32 0, %v89
    %v91 = vrot.slane %v21, %v90
    %v92 = vadd.f32 %v86, %v91
    %v93 = vadd.f32 %v87, %v91
    %v94 = vlaneseq
    %v95 = vshrl.u32 %v94, 7
    %v96 = vsub.s32 0, %v95
    %v97 = vrot.slane %v24, %v96
    %v99 = vsel %vm40, %v92, 0
    %v102 = vsel %vm40, %v93, 0
    %104 = vmatprep.subr.mxu0 0.0
    %105 = vmatpush1.msra.mxu0 %v28
    %106 = vmatprep.subr.mxu0 0.0
    %107 = vmatpush1.msra.mxu0 %v29
    %108 = vmatprep.subr.mxu0 0.0
    %109 = vmatpush1.msra.mxu0 %v30
    %110 = vmatprep.subr.mxu0 0.0
    %111 = vmatpush1.msra.mxu0 %v31
    %112 = vmatprep.subr.mxu0 0.0
    %113 = vmatpush1.msra.mxu0 0.0
    %114 = vmatprep.subr.mxu0 0.0
    %115 = vmatpush1.msra.mxu0 0.0
    %116 = vmatprep.subr.mxu0 0.0
    %117 = vmatpush1.msra.mxu0 0.0
    %118 = vmatprep.subr.mxu0 0.0
    %119 = vmatpush1.msra.mxu0 0.0
    %120 = vmatprep.subr.mxu0 0.0
    %121 = vmatpush1.msra.mxu0 0.0
    %122 = vmatprep.subr.mxu0 0.0
    %123 = vmatpush1.msra.mxu0 0.0
    %124 = vmatprep.subr.mxu0 0.0
    %125 = vmatpush1.msra.mxu0 0.0
    %126 = vmatprep.subr.mxu0 0.0
    %127 = vmatpush1.msra.mxu0 0.0
    %128 = vmatprep.subr.mxu0 0.0
    %129 = vmatpush1.msra.mxu0 0.0
    %130 = vmatprep.subr.mxu0 0.0
    %131 = vmatpush1.msra.mxu0 0.0
    %132 = vmatprep.subr.mxu0 0.0
    %133 = vmatpush1.msra.mxu0 0.0
    %134 = vmatprep.subr.mxu0 0.0
    %135 = vmatpush1.msra.mxu0 0.0
    %136 = vmatprep.subr.mxu0 0.0
    %137 = vmatpush1.msra.mxu0 0.0
    %138 = vmatprep.subr.mxu0 0.0
    %139 = vmatpush1.msra.mxu0 0.0
    %140 = vmatprep.subr.mxu0 0.0
    %141 = vmatpush1.msra.mxu0 0.0
    %142 = vmatprep.subr.mxu0 0.0
    %143 = vmatpush1.msra.mxu0 0.0
    %144 = vmatprep.subr.mxu0 0.0
    %145 = vmatpush1.msra.mxu0 0.0
    %146 = vmatprep.subr.mxu0 0.0
    %147 = vmatpush1.msra.mxu0 0.0
    %148 = vmatprep.subr.mxu0 0.0
    %149 = vmatpush1.msra.mxu0 0.0
    %150 = vmatprep.subr.mxu0 0.0
    %151 = vmatpush1.msra.mxu0 0.0
    %152 = vmatprep.subr.mxu0 0.0
    %153 = vmatpush1.msra.mxu0 0.0
    %154 = vmatprep.subr.mxu0 0.0
    %155 = vmatpush1.msra.mxu0 0.0
    %156 = vmatprep.subr.mxu0 0.0
    %157 = vmatpush1.msra.mxu0 0.0
    %158 = vmatprep.subr.mxu0 0.0
    %159 = vmatpush1.msra.mxu0 0.0
    %160 = vmatprep.subr.mxu0 0.0
    %161 = vmatpush1.msra.mxu0 0.0
    %162 = vmatprep.subr.mxu0 0.0
    %163 = vmatpush1.msra.mxu0 0.0
    %164 = vmatprep.subr.mxu0 0.0
    %165 = vmatpush1.msra.mxu0 0.0
    %166 = vmatprep.subr.mxu0 0.0
    %167 = vmatpush1.msra.mxu0 0.0
    %168 = vmatprep.mubr.f32.mxu0 0.0
    %169 = vmatmul.mubr.f32.gmra.mrb[0].mxu0 %v99
    %v170 = vpop.f32.mrb[0].mxu0
    %v171 = vadd.f32 %v97, %v170
    %v172 = vpop.f32.mrb[0].mxu0
    %173 = vmatprep.mubr.f32.mxu0 0.0
    %174 = vmatmul.mubr.f32.gmra.mrb[0].mxu0 %v102
    %v175 = vpop.f32.mrb[0].mxu0
    %v176 = vadd.f32 %v97, %v175
    %v177 = vpop.f32.mrb[0].mxu0
    %178 = vdwg.mxu0
    %181 = vrot.lane.b32.xlu0 %v171, 104
    %v182 = vpop.permute.xlu0 %181
    %183 = vrot.lane.b32.xlu0 %v176, 104
    %v184 = vpop.permute.xlu0 %183
    %185 = vrot.lane.b32.xlu0 %v171, 80
    %v186 = vpop.permute.xlu0 %185
    %187 = vrot.lane.b32.xlu0 %v176, 80
    %v188 = vpop.permute.xlu0 %187
    %189 = vrot.lane.b32.xlu0 %v171, 56
    %v190 = vpop.permute.xlu0 %189
    %191 = vrot.lane.b32.xlu0 %v176, 56
    %v192 = vpop.permute.xlu0 %191
    %v193 = vlaneseq
    %v194 = vshrl.u32 %v193, 7
    %v195 = vlaneseq
    %v196 = vand.u32 %v195, 127
    %vm197 = vcmp.gt.s32.totalorder %v196, %v194
    %v198 = vsel %vm197, -1e+30, 0.0
    %199 = vrot.lane.b32.xlu0 %v171, 120
    %v200 = vpop.permute.xlu0 %199
    %vm201 = vcmask 64512
    %v202 = vsel %vm201, %v171, 0
    %v204 = vsel %vm201, %v200, 0
    %206 = vmatprep.subr.mxu0 0.0
    %207 = vmatpush1.xpose.msra.mxu0 %v204
    %208 = vmatprep.subr.mxu0 0.0
    %209 = vmatpush1.xpose.msra.mxu0 0.0
    %210 = vmatprep.subr.mxu0 0.0
    %211 = vmatpush1.xpose.msra.mxu0 0.0
    %212 = vmatprep.subr.mxu0 0.0
    %213 = vmatpush1.xpose.msra.mxu0 0.0
    %214 = vmatprep.subr.mxu0 0.0
    %215 = vmatpush1.xpose.msra.mxu0 0.0
    %216 = vmatprep.subr.mxu0 0.0
    %217 = vmatpush1.xpose.msra.mxu0 0.0
    %218 = vmatprep.subr.mxu0 0.0
    %219 = vmatpush1.xpose.msra.mxu0 0.0
    %220 = vmatprep.subr.mxu0 0.0
    %221 = vmatpush1.xpose.msra.mxu0 0.0
    %222 = vmatprep.subr.mxu0 0.0
    %223 = vmatpush1.xpose.msra.mxu0 0.0
    %224 = vmatprep.subr.mxu0 0.0
    %225 = vmatpush1.xpose.msra.mxu0 0.0
    %226 = vmatprep.subr.mxu0 0.0
    %227 = vmatpush1.xpose.msra.mxu0 0.0
    %228 = vmatprep.subr.mxu0 0.0
    %229 = vmatpush1.xpose.msra.mxu0 0.0
    %230 = vmatprep.subr.mxu0 0.0
    %231 = vmatpush1.xpose.msra.mxu0 0.0
    %232 = vmatprep.subr.mxu0 0.0
    %233 = vmatpush1.xpose.msra.mxu0 0.0
    %234 = vmatprep.subr.mxu0 0.0
    %235 = vmatpush1.xpose.msra.mxu0 0.0
    %236 = vmatprep.subr.mxu0 0.0
    %237 = vmatpush1.xpose.msra.mxu0 0.0
    %238 = vmatprep.subr.mxu0 0.0
    %239 = vmatpush1.xpose.msra.mxu0 0.0
    %240 = vmatprep.subr.mxu0 0.0
    %241 = vmatpush1.xpose.msra.mxu0 0.0
    %242 = vmatprep.subr.mxu0 0.0
    %243 = vmatpush1.xpose.msra.mxu0 0.0
    %244 = vmatprep.subr.mxu0 0.0
    %245 = vmatpush1.xpose.msra.mxu0 0.0
    %246 = vmatprep.subr.mxu0 0.0
    %247 = vmatpush1.xpose.msra.mxu0 0.0
    %248 = vmatprep.subr.mxu0 0.0
    %249 = vmatpush1.xpose.msra.mxu0 0.0
    %250 = vmatprep.subr.mxu0 0.0
    %251 = vmatpush1.xpose.msra.mxu0 0.0
    %252 = vmatprep.subr.mxu0 0.0
    %253 = vmatpush1.xpose.msra.mxu0 0.0
    %254 = vmatprep.subr.mxu0 0.0
    %255 = vmatpush1.xpose.msra.mxu0 0.0
    %256 = vmatprep.subr.mxu0 0.0
    %257 = vmatpush1.xpose.msra.mxu0 0.0
    %258 = vmatprep.subr.mxu0 0.0
    %259 = vmatpush1.xpose.msra.mxu0 0.0
    %260 = vmatprep.subr.mxu0 0.0
    %261 = vmatpush1.xpose.msra.mxu0 0.0
    %262 = vmatprep.subr.mxu0 0.0
    %263 = vmatpush1.xpose.msra.mxu0 0.0
    %264 = vmatprep.subr.mxu0 0.0
    %265 = vmatpush1.xpose.msra.mxu0 0.0
    %266 = vmatprep.subr.mxu0 0.0
    %267 = vmatpush1.xpose.msra.mxu0 0.0
    %268 = vmatprep.subr.mxu0 0.0
    %269 = vmatpush1.xpose.msra.mxu0 0.0
    %270 = vmatprep.mubr.f32.mxu0 0.0
    %271 = vmatmul.mubr.f32.gmra.mrb[0].mxu0 %v202
    %v272 = vpop.f32.mrb[0].mxu0
    %v273 = vadd.f32 0.0, %v272
    %v274 = vpop.f32.mrb[0].mxu0
    %275 = vdwg.mxu0
    %276 = vrot.lane.b32.xlu0 %v176, 120
    %v277 = vpop.permute.xlu0 %276
    %v278 = vsel %vm201, %v176, 0
    %v280 = vsel %vm201, %v277, 0
    %282 = vmatprep.subr.mxu0 0.0
    %283 = vmatpush1.xpose.msra.mxu0 %v280
    %284 = vmatprep.subr.mxu0 0.0
    %285 = vmatpush1.xpose.msra.mxu0 0.0
    %286 = vmatprep.subr.mxu0 0.0
    %287 = vmatpush1.xpose.msra.mxu0 0.0
    %288 = vmatprep.subr.mxu0 0.0
    %289 = vmatpush1.xpose.msra.mxu0 0.0
    %290 = vmatprep.subr.mxu0 0.0
    %291 = vmatpush1.xpose.msra.mxu0 0.0
    %292 = vmatprep.subr.mxu0 0.0
    %293 = vmatpush1.xpose.msra.mxu0 0.0
    %294 = vmatprep.subr.mxu0 0.0
    %295 = vmatpush1.xpose.msra.mxu0 0.0
    %296 = vmatprep.subr.mxu0 0.0
    %297 = vmatpush1.xpose.msra.mxu0 0.0
    %298 = vmatprep.subr.mxu0 0.0
    %299 = vmatpush1.xpose.msra.mxu0 0.0
    %300 = vmatprep.subr.mxu0 0.0
    %301 = vmatpush1.xpose.msra.mxu0 0.0
    %302 = vmatprep.subr.mxu0 0.0
    %303 = vmatpush1.xpose.msra.mxu0 0.0
    %304 = vmatprep.subr.mxu0 0.0
    %305 = vmatpush1.xpose.msra.mxu0 0.0
    %306 = vmatprep.subr.mxu0 0.0
    %307 = vmatpush1.xpose.msra.mxu0 0.0
    %308 = vmatprep.subr.mxu0 0.0
    %309 = vmatpush1.xpose.msra.mxu0 0.0
    %310 = vmatprep.subr.mxu0 0.0
    %311 = vmatpush1.xpose.msra.mxu0 0.0
    %312 = vmatprep.subr.mxu0 0.0
    %313 = vmatpush1.xpose.msra.mxu0 0.0
    %314 = vmatprep.subr.mxu0 0.0
    %315 = vmatpush1.xpose.msra.mxu0 0.0
    %316 = vmatprep.subr.mxu0 0.0
    %317 = vmatpush1.xpose.msra.mxu0 0.0
    %318 = vmatprep.subr.mxu0 0.0
    %319 = vmatpush1.xpose.msra.mxu0 0.0
    %320 = vmatprep.subr.mxu0 0.0
    %321 = vmatpush1.xpose.msra.mxu0 0.0
    %322 = vmatprep.subr.mxu0 0.0
    %323 = vmatpush1.xpose.msra.mxu0 0.0
    %324 = vmatprep.subr.mxu0 0.0
    %325 = vmatpush1.xpose.msra.mxu0 0.0
    %326 = vmatprep.subr.mxu0 0.0
    %327 = vmatpush1.xpose.msra.mxu0 0.0
    %328 = vmatprep.subr.mxu0 0.0
    %329 = vmatpush1.xpose.msra.mxu0 0.0
    %330 = vmatprep.subr.mxu0 0.0
    %331 = vmatpush1.xpose.msra.mxu0 0.0
    %332 = vmatprep.subr.mxu0 0.0
    %333 = vmatpush1.xpose.msra.mxu0 0.0
    %334 = vmatprep.subr.mxu0 0.0
    %335 = vmatpush1.xpose.msra.mxu0 0.0
    %336 = vmatprep.subr.mxu0 0.0
    %337 = vmatpush1.xpose.msra.mxu0 0.0
    %338 = vmatprep.subr.mxu0 0.0
    %339 = vmatpush1.xpose.msra.mxu0 0.0
    %340 = vmatprep.subr.mxu0 0.0
    %341 = vmatpush1.xpose.msra.mxu0 0.0
    %342 = vmatprep.subr.mxu0 0.0
    %343 = vmatpush1.xpose.msra.mxu0 0.0
    %344 = vmatprep.subr.mxu0 0.0
    %345 = vmatpush1.xpose.msra.mxu0 0.0
    %346 = vmatprep.mubr.f32.mxu0 0.0
    %347 = vmatmul.mubr.f32.gmra.mrb[0].mxu0 %v278
    %v348 = vpop.f32.mrb[0].mxu0
    %v349 = vadd.f32 0.0, %v348
    %v350 = vpop.f32.mrb[0].mxu0
    %351 = vdwg.mxu0
    %352 = vrot.lane.b32.xlu0 %v182, 120
    %v353 = vpop.permute.xlu0 %352
    %v354 = vsel %vm201, %v182, 0
    %v356 = vsel %vm201, %v353, 0
    %358 = vmatprep.subr.mxu0 0.0
    %359 = vmatpush1.xpose.msra.mxu0 %v356
    %360 = vmatprep.subr.mxu0 0.0
    %361 = vmatpush1.xpose.msra.mxu0 0.0
    %362 = vmatprep.subr.mxu0 0.0
    %363 = vmatpush1.xpose.msra.mxu0 0.0
    %364 = vmatprep.subr.mxu0 0.0
    %365 = vmatpush1.xpose.msra.mxu0 0.0
    %366 = vmatprep.subr.mxu0 0.0
    %367 = vmatpush1.xpose.msra.mxu0 0.0
    %368 = vmatprep.subr.mxu0 0.0
    %369 = vmatpush1.xpose.msra.mxu0 0.0
    %370 = vmatprep.subr.mxu0 0.0
    %371 = vmatpush1.xpose.msra.mxu0 0.0
    %372 = vmatprep.subr.mxu0 0.0
    %373 = vmatpush1.xpose.msra.mxu0 0.0
    %374 = vmatprep.subr.mxu0 0.0
    %375 = vmatpush1.xpose.msra.mxu0 0.0
    %376 = vmatprep.subr.mxu0 0.0
    %377 = vmatpush1.xpose.msra.mxu0 0.0
    %378 = vmatprep.subr.mxu0 0.0
    %379 = vmatpush1.xpose.msra.mxu0 0.0
    %380 = vmatprep.subr.mxu0 0.0
    %381 = vmatpush1.xpose.msra.mxu0 0.0
    %382 = vmatprep.subr.mxu0 0.0
    %383 = vmatpush1.xpose.msra.mxu0 0.0
    %384 = vmatprep.subr.mxu0 0.0
    %385 = vmatpush1.xpose.msra.mxu0 0.0
    %386 = vmatprep.subr.mxu0 0.0
    %387 = vmatpush1.xpose.msra.mxu0 0.0
    %388 = vmatprep.subr.mxu0 0.0
    %389 = vmatpush1.xpose.msra.mxu0 0.0
    %390 = vmatprep.subr.mxu0 0.0
    %391 = vmatpush1.xpose.msra.mxu0 0.0
    %392 = vmatprep.subr.mxu0 0.0
    %393 = vmatpush1.xpose.msra.mxu0 0.0
    %394 = vmatprep.subr.mxu0 0.0
    %395 = vmatpush1.xpose.msra.mxu0 0.0
    %396 = vmatprep.subr.mxu0 0.0
    %397 = vmatpush1.xpose.msra.mxu0 0.0
    %398 = vmatprep.subr.mxu0 0.0
    %399 = vmatpush1.xpose.msra.mxu0 0.0
    %400 = vmatprep.subr.mxu0 0.0
    %401 = vmatpush1.xpose.msra.mxu0 0.0
    %402 = vmatprep.subr.mxu0 0.0
    %403 = vmatpush1.xpose.msra.mxu0 0.0
    %404 = vmatprep.subr.mxu0 0.0
    %405 = vmatpush1.xpose.msra.mxu0 0.0
    %406 = vmatprep.subr.mxu0 0.0
    %407 = vmatpush1.xpose.msra.mxu0 0.0
    %408 = vmatprep.subr.mxu0 0.0
    %409 = vmatpush1.xpose.msra.mxu0 0.0
    %410 = vmatprep.subr.mxu0 0.0
    %411 = vmatpush1.xpose.msra.mxu0 0.0
    %412 = vmatprep.subr.mxu0 0.0
    %413 = vmatpush1.xpose.msra.mxu0 0.0
    %414 = vmatprep.subr.mxu0 0.0
    %415 = vmatpush1.xpose.msra.mxu0 0.0
    %416 = vmatprep.subr.mxu0 0.0
    %417 = vmatpush1.xpose.msra.mxu0 0.0
    %418 = vmatprep.subr.mxu0 0.0
    %419 = vmatpush1.xpose.msra.mxu0 0.0
    %420 = vmatprep.subr.mxu0 0.0
    %421 = vmatpush1.xpose.msra.mxu0 0.0
    %422 = vmatprep.mubr.f32.mxu0 0.0
    %423 = vmatmul.mubr.f32.gmra.mrb[0].mxu0 %v354
    %v424 = vpop.f32.mrb[0].mxu0
    %v425 = vadd.f32 0.0, %v424
    %v426 = vpop.f32.mrb[0].mxu0
    %427 = vdwg.mxu0
    %428 = vrot.lane.b32.xlu0 %v184, 120
    %v429 = vpop.permute.xlu0 %428
    %v430 = vsel %vm201, %v184, 0
    %v432 = vsel %vm201, %v429, 0
    %434 = vmatprep.subr.mxu0 0.0
    %435 = vmatpush1.xpose.msra.mxu0 %v432
    %436 = vmatprep.subr.mxu0 0.0
    %437 = vmatpush1.xpose.msra.mxu0 0.0
    %438 = vmatprep.subr.mxu0 0.0
    %439 = vmatpush1.xpose.msra.mxu0 0.0
    %440 = vmatprep.subr.mxu0 0.0
    %441 = vmatpush1.xpose.msra.mxu0 0.0
    %442 = vmatprep.subr.mxu0 0.0
    %443 = vmatpush1.xpose.msra.mxu0 0.0
    %444 = vmatprep.subr.mxu0 0.0
    %445 = vmatpush1.xpose.msra.mxu0 0.0
    %446 = vmatprep.subr.mxu0 0.0
    %447 = vmatpush1.xpose.msra.mxu0 0.0
    %448 = vmatprep.subr.mxu0 0.0
    %449 = vmatpush1.xpose.msra.mxu0 0.0
    %450 = vmatprep.subr.mxu0 0.0
    %451 = vmatpush1.xpose.msra.mxu0 0.0
    %452 = vmatprep.subr.mxu0 0.0
    %453 = vmatpush1.xpose.msra.mxu0 0.0
    %454 = vmatprep.subr.mxu0 0.0
    %455 = vmatpush1.xpose.msra.mxu0 0.0
    %456 = vmatprep.subr.mxu0 0.0
    %457 = vmatpush1.xpose.msra.mxu0 0.0
    %458 = vmatprep.subr.mxu0 0.0
    %459 = vmatpush1.xpose.msra.mxu0 0.0
    %460 = vmatprep.subr.mxu0 0.0
    %461 = vmatpush1.xpose.msra.mxu0 0.0
    %462 = vmatprep.subr.mxu0 0.0
    %463 = vmatpush1.xpose.msra.mxu0 0.0
    %464 = vmatprep.subr.mxu0 0.0
    %465 = vmatpush1.xpose.msra.mxu0 0.0
    %466 = vmatprep.subr.mxu0 0.0
    %467 = vmatpush1.xpose.msra.mxu0 0.0
    %468 = vmatprep.subr.mxu0 0.0
    %469 = vmatpush1.xpose.msra.mxu0 0.0
    %470 = vmatprep.subr.mxu0 0.0
    %471 = vmatpush1.xpose.msra.mxu0 0.0
    %472 = vmatprep.subr.mxu0 0.0
    %473 = vmatpush1.xpose.msra.mxu0 0.0
    %474 = vmatprep.subr.mxu0 0.0
    %475 = vmatpush1.xpose.msra.mxu0 0.0
    %476 = vmatprep.subr.mxu0 0.0
    %477 = vmatpush1.xpose.msra.mxu0 0.0
    %478 = vmatprep.subr.mxu0 0.0
    %479 = vmatpush1.xpose.msra.mxu0 0.0
    %480 = vmatprep.subr.mxu0 0.0
    %481 = vmatpush1.xpose.msra.mxu0 0.0
    %482 = vmatprep.subr.mxu0 0.0
    %483 = vmatpush1.xpose.msra.mxu0 0.0
    %484 = vmatprep.subr.mxu0 0.0
    %485 = vmatpush1.xpose.msra.mxu0 0.0
    %486 = vmatprep.subr.mxu0 0.0
    %487 = vmatpush1.xpose.msra.mxu0 0.0
    %488 = vmatprep.subr.mxu0 0.0
    %489 = vmatpush1.xpose.msra.mxu0 0.0
    %490 = vmatprep.subr.mxu0 0.0
    %491 = vmatpush1.xpose.msra.mxu0 0.0
    %492 = vmatprep.subr.mxu0 0.0
    %493 = vmatpush1.xpose.msra.mxu0 0.0
    %494 = vmatprep.subr.mxu0 0.0
    %495 = vmatpush1.xpose.msra.mxu0 0.0
    %496 = vmatprep.subr.mxu0 0.0
    %497 = vmatpush1.xpose.msra.mxu0 0.0
    %498 = vmatprep.mubr.f32.mxu0 0.0
    %499 = vmatmul.mubr.f32.gmra.mrb[0].mxu0 %v430
    %v500 = vpop.f32.mrb[0].mxu0
    %v501 = vadd.f32 0.0, %v500
    %v502 = vpop.f32.mrb[0].mxu0
    %503 = vdwg.mxu0
    %504 = vrot.lane.b32.xlu0 %v186, 120
    %v505 = vpop.permute.xlu0 %504
    %v506 = vsel %vm201, %v186, 0
    %v508 = vsel %vm201, %v505, 0
    %510 = vmatprep.subr.mxu0 0.0
    %511 = vmatpush1.xpose.msra.mxu0 %v508
    %512 = vmatprep.subr.mxu0 0.0
    %513 = vmatpush1.xpose.msra.mxu0 0.0
    %514 = vmatprep.subr.mxu0 0.0
    %515 = vmatpush1.xpose.msra.mxu0 0.0
    %516 = vmatprep.subr.mxu0 0.0
    %517 = vmatpush1.xpose.msra.mxu0 0.0
    %518 = vmatprep.subr.mxu0 0.0
    %519 = vmatpush1.xpose.msra.mxu0 0.0
    %520 = vmatprep.subr.mxu0 0.0
    %521 = vmatpush1.xpose.msra.mxu0 0.0
    %522 = vmatprep.subr.mxu0 0.0
    %523 = vmatpush1.xpose.msra.mxu0 0.0
    %524 = vmatprep.subr.mxu0 0.0
    %525 = vmatpush1.xpose.msra.mxu0 0.0
    %526 = vmatprep.subr.mxu0 0.0
    %527 = vmatpush1.xpose.msra.mxu0 0.0
    %528 = vmatprep.subr.mxu0 0.0
    %529 = vmatpush1.xpose.msra.mxu0 0.0
    %530 = vmatprep.subr.mxu0 0.0
    %531 = vmatpush1.xpose.msra.mxu0 0.0
    %532 = vmatprep.subr.mxu0 0.0
    %533 = vmatpush1.xpose.msra.mxu0 0.0
    %534 = vmatprep.subr.mxu0 0.0
    %535 = vmatpush1.xpose.msra.mxu0 0.0
    %536 = vmatprep.subr.mxu0 0.0
    %537 = vmatpush1.xpose.msra.mxu0 0.0
    %538 = vmatprep.subr.mxu0 0.0
    %539 = vmatpush1.xpose.msra.mxu0 0.0
    %540 = vmatprep.subr.mxu0 0.0
    %541 = vmatpush1.xpose.msra.mxu0 0.0
    %542 = vmatprep.subr.mxu0 0.0
    %543 = vmatpush1.xpose.msra.mxu0 0.0
    %544 = vmatprep.subr.mxu0 0.0
    %545 = vmatpush1.xpose.msra.mxu0 0.0
    %546 = vmatprep.subr.mxu0 0.0
    %547 = vmatpush1.xpose.msra.mxu0 0.0
    %548 = vmatprep.subr.mxu0 0.0
    %549 = vmatpush1.xpose.msra.mxu0 0.0
    %550 = vmatprep.subr.mxu0 0.0
    %551 = vmatpush1.xpose.msra.mxu0 0.0
    %552 = vmatprep.subr.mxu0 0.0
    %553 = vmatpush1.xpose.msra.mxu0 0.0
    %554 = vmatprep.subr.mxu0 0.0
    %555 = vmatpush1.xpose.msra.mxu0 0.0
    %556 = vmatprep.subr.mxu0 0.0
    %557 = vmatpush1.xpose.msra.mxu0 0.0
    %558 = vmatprep.subr.mxu0 0.0
    %559 = vmatpush1.xpose.msra.mxu0 0.0
    %560 = vmatprep.subr.mxu0 0.0
    %561 = vmatpush1.xpose.msra.mxu0 0.0
    %562 = vmatprep.subr.mxu0 0.0
    %563 = vmatpush1.xpose.msra.mxu0 0.0
    %564 = vmatprep.subr.mxu0 0.0
    %565 = vmatpush1.xpose.msra.mxu0 0.0
    %566 = vmatprep.subr.mxu0 0.0
    %567 = vmatpush1.xpose.msra.mxu0 0.0
    %568 = vmatprep.subr.mxu0 0.0
    %569 = vmatpush1.xpose.msra.mxu0 0.0
    %570 = vmatprep.subr.mxu0 0.0
    %571 = vmatpush1.xpose.msra.mxu0 0.0
    %572 = vmatprep.subr.mxu0 0.0
    %573 = vmatpush1.xpose.msra.mxu0 0.0
    %574 = vmatprep.mubr.f32.mxu0 0.0
    %575 = vmatmul.mubr.f32.gmra.mrb[0].mxu0 %v506
    %v576 = vpop.f32.mrb[0].mxu0
    %v577 = vadd.f32 0.0, %v576
    %v578 = vpop.f32.mrb[0].mxu0
    %579 = vdwg.mxu0
    %580 = vrot.lane.b32.xlu0 %v188, 120
    %v581 = vpop.permute.xlu0 %580
    %v582 = vsel %vm201, %v188, 0
    %v584 = vsel %vm201, %v581, 0
    %586 = vmatprep.subr.mxu0 0.0
    %587 = vmatpush1.xpose.msra.mxu0 %v584
    %588 = vmatprep.subr.mxu0 0.0
    %589 = vmatpush1.xpose.msra.mxu0 0.0
    %590 = vmatprep.subr.mxu0 0.0
    %591 = vmatpush1.xpose.msra.mxu0 0.0
    %592 = vmatprep.subr.mxu0 0.0
    %593 = vmatpush1.xpose.msra.mxu0 0.0
    %594 = vmatprep.subr.mxu0 0.0
    %595 = vmatpush1.xpose.msra.mxu0 0.0
    %596 = vmatprep.subr.mxu0 0.0
    %597 = vmatpush1.xpose.msra.mxu0 0.0
    %598 = vmatprep.subr.mxu0 0.0
    %599 = vmatpush1.xpose.msra.mxu0 0.0
    %600 = vmatprep.subr.mxu0 0.0
    %601 = vmatpush1.xpose.msra.mxu0 0.0
    %602 = vmatprep.subr.mxu0 0.0
    %603 = vmatpush1.xpose.msra.mxu0 0.0
    %604 = vmatprep.subr.mxu0 0.0
    %605 = vmatpush1.xpose.msra.mxu0 0.0
    %606 = vmatprep.subr.mxu0 0.0
    %607 = vmatpush1.xpose.msra.mxu0 0.0
    %608 = vmatprep.subr.mxu0 0.0
    %609 = vmatpush1.xpose.msra.mxu0 0.0
    %610 = vmatprep.subr.mxu0 0.0
    %611 = vmatpush1.xpose.msra.mxu0 0.0
    %612 = vmatprep.subr.mxu0 0.0
    %613 = vmatpush1.xpose.msra.mxu0 0.0
    %614 = vmatprep.subr.mxu0 0.0
    %615 = vmatpush1.xpose.msra.mxu0 0.0
    %616 = vmatprep.subr.mxu0 0.0
    %617 = vmatpush1.xpose.msra.mxu0 0.0
    %618 = vmatprep.subr.mxu0 0.0
    %619 = vmatpush1.xpose.msra.mxu0 0.0
    %620 = vmatprep.subr.mxu0 0.0
    %621 = vmatpush1.xpose.msra.mxu0 0.0
    %622 = vmatprep.subr.mxu0 0.0
    %623 = vmatpush1.xpose.msra.mxu0 0.0
    %624 = vmatprep.subr.mxu0 0.0
    %625 = vmatpush1.xpose.msra.mxu0 0.0
    %626 = vmatprep.subr.mxu0 0.0
    %627 = vmatpush1.xpose.msra.mxu0 0.0
    %628 = vmatprep.subr.mxu0 0.0
    %629 = vmatpush1.xpose.msra.mxu0 0.0
    %630 = vmatprep.subr.mxu0 0.0
    %631 = vmatpush1.xpose.msra.mxu0 0.0
    %632 = vmatprep.subr.mxu0 0.0
    %633 = vmatpush1.xpose.msra.mxu0 0.0
    %634 = vmatprep.subr.mxu0 0.0
    %635 = vmatpush1.xpose.msra.mxu0 0.0
    %636 = vmatprep.subr.mxu0 0.0
    %637 = vmatpush1.xpose.msra.mxu0 0.0
    %638 = vmatprep.subr.mxu0 0.0
    %639 = vmatpush1.xpose.msra.mxu0 0.0
    %640 = vmatprep.subr.mxu0 0.0
    %641 = vmatpush1.xpose.msra.mxu0 0.0
    %642 = vmatprep.subr.mxu0 0.0
    %643 = vmatpush1.xpose.msra.mxu0 0.0
    %644 = vmatprep.subr.mxu0 0.0
    %645 = vmatpush1.xpose.msra.mxu0 0.0
    %646 = vmatprep.subr.mxu0 0.0
    %647 = vmatpush1.xpose.msra.mxu0 0.0
    %648 = vmatprep.subr.mxu0 0.0
    %649 = vmatpush1.xpose.msra.mxu0 0.0
    %650 = vmatprep.mubr.f32.mxu0 0.0
    %651 = vmatmul.mubr.f32.gmra.mrb[0].mxu0 %v582
    %v652 = vpop.f32.mrb[0].mxu0
    %v653 = vadd.f32 0.0, %v652
    %v654 = vpop.f32.mrb[0].mxu0
    %655 = vdwg.mxu0
    %656 = vrot.lane.b32.xlu0 %v190, 120
    %v657 = vpop.permute.xlu0 %656
    %v658 = vsel %vm201, %v190, 0
    %v660 = vsel %vm201, %v657, 0
    %662 = vmatprep.subr.mxu0 0.0
    %663 = vmatpush1.xpose.msra.mxu0 %v660
    %664 = vmatprep.subr.mxu0 0.0
    %665 = vmatpush1.xpose.msra.mxu0 0.0
    %666 = vmatprep.subr.mxu0 0.0
    %667 = vmatpush1.xpose.msra.mxu0 0.0
    %668 = vmatprep.subr.mxu0 0.0
    %669 = vmatpush1.xpose.msra.mxu0 0.0
    %670 = vmatprep.subr.mxu0 0.0
    %671 = vmatpush1.xpose.msra.mxu0 0.0
    %672 = vmatprep.subr.mxu0 0.0
    %673 = vmatpush1.xpose.msra.mxu0 0.0
    %674 = vmatprep.subr.mxu0 0.0
    %675 = vmatpush1.xpose.msra.mxu0 0.0
    %676 = vmatprep.subr.mxu0 0.0
    %677 = vmatpush1.xpose.msra.mxu0 0.0
    %678 = vmatprep.subr.mxu0 0.0
    %679 = vmatpush1.xpose.msra.mxu0 0.0
    %680 = vmatprep.subr.mxu0 0.0
    %681 = vmatpush1.xpose.msra.mxu0 0.0
    %682 = vmatprep.subr.mxu0 0.0
    %683 = vmatpush1.xpose.msra.mxu0 0.0
    %684 = vmatprep.subr.mxu0 0.0
    %685 = vmatpush1.xpose.msra.mxu0 0.0
    %686 = vmatprep.subr.mxu0 0.0
    %687 = vmatpush1.xpose.msra.mxu0 0.0
    %688 = vmatprep.subr.mxu0 0.0
    %689 = vmatpush1.xpose.msra.mxu0 0.0
    %690 = vmatprep.subr.mxu0 0.0
    %691 = vmatpush1.xpose.msra.mxu0 0.0
    %692 = vmatprep.subr.mxu0 0.0
    %693 = vmatpush1.xpose.msra.mxu0 0.0
    %694 = vmatprep.subr.mxu0 0.0
    %695 = vmatpush1.xpose.msra.mxu0 0.0
    %696 = vmatprep.subr.mxu0 0.0
    %697 = vmatpush1.xpose.msra.mxu0 0.0
    %698 = vmatprep.subr.mxu0 0.0
    %699 = vmatpush1.xpose.msra.mxu0 0.0
    %700 = vmatprep.subr.mxu0 0.0
    %701 = vmatpush1.xpose.msra.mxu0 0.0
    %702 = vmatprep.subr.mxu0 0.0
    %703 = vmatpush1.xpose.msra.mxu0 0.0
    %704 = vmatprep.subr.mxu0 0.0
    %705 = vmatpush1.xpose.msra.mxu0 0.0
    %706 = vmatprep.subr.mxu0 0.0
    %707 = vmatpush1.xpose.msra.mxu0 0.0
    %708 = vmatprep.subr.mxu0 0.0
    %709 = vmatpush1.xpose.msra.mxu0 0.0
    %710 = vmatprep.subr.mxu0 0.0
    %711 = vmatpush1.xpose.msra.mxu0 0.0
    %712 = vmatprep.subr.mxu0 0.0
    %713 = vmatpush1.xpose.msra.mxu0 0.0
    %714 = vmatprep.subr.mxu0 0.0
    %715 = vmatpush1.xpose.msra.mxu0 0.0
    %716 = vmatprep.subr.mxu0 0.0
    %717 = vmatpush1.xpose.msra.mxu0 0.0
    %718 = vmatprep.subr.mxu0 0.0
    %719 = vmatpush1.xpose.msra.mxu0 0.0
    %720 = vmatprep.subr.mxu0 0.0
    %721 = vmatpush1.xpose.msra.mxu0 0.0
    %722 = vmatprep.subr.mxu0 0.0
    %723 = vmatpush1.xpose.msra.mxu0 0.0
    %724 = vmatprep.subr.mxu0 0.0
    %725 = vmatpush1.xpose.msra.mxu0 0.0
    %726 = vmatprep.mubr.f32.mxu0 0.0
    %727 = vmatmul.mubr.f32.gmra.mrb[0].mxu0 %v658
    %v728 = vpop.f32.mrb[0].mxu0
    %v729 = vadd.f32 0.0, %v728
    %v730 = vpop.f32.mrb[0].mxu0
    %731 = vdwg.mxu0
    %732 = vrot.lane.b32.xlu0 %v192, 120
    %v733 = vpop.permute.xlu0 %732
    %v734 = vsel %vm201, %v192, 0
    %v736 = vsel %vm201, %v733, 0
    %738 = vmatprep.subr.mxu0 0.0
    %739 = vmatpush1.xpose.msra.mxu0 %v736
    %740 = vmatprep.subr.mxu0 0.0
    %741 = vmatpush1.xpose.msra.mxu0 0.0
    %742 = vmatprep.subr.mxu0 0.0
    %743 = vmatpush1.xpose.msra.mxu0 0.0
    %744 = vmatprep.subr.mxu0 0.0
    %745 = vmatpush1.xpose.msra.mxu0 0.0
    %746 = vmatprep.subr.mxu0 0.0
    %747 = vmatpush1.xpose.msra.mxu0 0.0
    %748 = vmatprep.subr.mxu0 0.0
    %749 = vmatpush1.xpose.msra.mxu0 0.0
    %750 = vmatprep.subr.mxu0 0.0
    %751 = vmatpush1.xpose.msra.mxu0 0.0
    %752 = vmatprep.subr.mxu0 0.0
    %753 = vmatpush1.xpose.msra.mxu0 0.0
    %754 = vmatprep.subr.mxu0 0.0
    %755 = vmatpush1.xpose.msra.mxu0 0.0
    %756 = vmatprep.subr.mxu0 0.0
    %757 = vmatpush1.xpose.msra.mxu0 0.0
    %758 = vmatprep.subr.mxu0 0.0
    %759 = vmatpush1.xpose.msra.mxu0 0.0
    %760 = vmatprep.subr.mxu0 0.0
    %761 = vmatpush1.xpose.msra.mxu0 0.0
    %762 = vmatprep.subr.mxu0 0.0
    %763 = vmatpush1.xpose.msra.mxu0 0.0
    %764 = vmatprep.subr.mxu0 0.0
    %765 = vmatpush1.xpose.msra.mxu0 0.0
    %766 = vmatprep.subr.mxu0 0.0
    %767 = vmatpush1.xpose.msra.mxu0 0.0
    %768 = vmatprep.subr.mxu0 0.0
    %769 = vmatpush1.xpose.msra.mxu0 0.0
    %770 = vmatprep.subr.mxu0 0.0
    %771 = vmatpush1.xpose.msra.mxu0 0.0
    %772 = vmatprep.subr.mxu0 0.0
    %773 = vmatpush1.xpose.msra.mxu0 0.0
    %774 = vmatprep.subr.mxu0 0.0
    %775 = vmatpush1.xpose.msra.mxu0 0.0
    %776 = vmatprep.subr.mxu0 0.0
    %777 = vmatpush1.xpose.msra.mxu0 0.0
    %778 = vmatprep.subr.mxu0 0.0
    %779 = vmatpush1.xpose.msra.mxu0 0.0
    %780 = vmatprep.subr.mxu0 0.0
    %781 = vmatpush1.xpose.msra.mxu0 0.0
    %782 = vmatprep.subr.mxu0 0.0
    %783 = vmatpush1.xpose.msra.mxu0 0.0
    %784 = vmatprep.subr.mxu0 0.0
    %785 = vmatpush1.xpose.msra.mxu0 0.0
    %786 = vmatprep.subr.mxu0 0.0
    %787 = vmatpush1.xpose.msra.mxu0 0.0
    %788 = vmatprep.subr.mxu0 0.0
    %789 = vmatpush1.xpose.msra.mxu0 0.0
    %790 = vmatprep.subr.mxu0 0.0
    %791 = vmatpush1.xpose.msra.mxu0 0.0
    %792 = vmatprep.subr.mxu0 0.0
    %793 = vmatpush1.xpose.msra.mxu0 0.0
    %794 = vmatprep.subr.mxu0 0.0
    %795 = vmatpush1.xpose.msra.mxu0 0.0
    %796 = vmatprep.subr.mxu0 0.0
    %797 = vmatpush1.xpose.msra.mxu0 0.0
    %798 = vmatprep.subr.mxu0 0.0
    %799 = vmatpush1.xpose.msra.mxu0 0.0
    %800 = vmatprep.subr.mxu0 0.0
    %801 = vmatpush1.xpose.msra.mxu0 0.0
    %802 = vmatprep.mubr.f32.mxu0 0.0
    %803 = vmatmul.mubr.f32.gmra.mrb[0].mxu0 %v734
    %v804 = vpop.f32.mrb[0].mxu0
    %v805 = vadd.f32 0.0, %v804
    %v806 = vpop.f32.mrb[0].mxu0
    %807 = vdwg.mxu0
    %v808 = vmul.f32 %v273, 0.35355338
    %v809 = vmul.f32 %v349, 0.35355338
    %v810 = vmul.f32 %v425, 0.35355338
    %v811 = vmul.f32 %v501, 0.35355338
    %v812 = vmul.f32 %v577, 0.35355338
    %v813 = vmul.f32 %v653, 0.35355338
    %v814 = vmul.f32 %v729, 0.35355338
    %v815 = vmul.f32 %v805, 0.35355338
    %v816 = vadd.f32 %v808, %v198
    %v817 = vadd.f32 %v809, %v198
    %v818 = vadd.f32 %v810, %v198
    %v819 = vadd.f32 %v811, %v198
    %v820 = vadd.f32 %v812, %v198
    %v821 = vadd.f32 %v813, %v198
    %v822 = vadd.f32 %v814, %v198
    %v823 = vadd.f32 %v815, %v198
    %v824 = vsel %vm201, %v816, -inf
    %825 = vmax.xlane.f32.xlu0 %v824
    %v826 = vpop.xlane.xlu0 %825
    %v827 = vsel %vm201, %v817, -inf
    %828 = vmax.xlane.f32.xlu0 %v827
    %v829 = vpop.xlane.xlu0 %828
    %v830 = vsel %vm201, %v818, -inf
    %831 = vmax.xlane.f32.xlu0 %v830
    %v832 = vpop.xlane.xlu0 %831
    %v833 = vsel %vm201, %v819, -inf
    %834 = vmax.xlane.f32.xlu0 %v833
    %v835 = vpop.xlane.xlu0 %834
    %v836 = vsel %vm201, %v820, -inf
    %837 = vmax.xlane.f32.xlu0 %v836
    %v838 = vpop.xlane.xlu0 %837
    %v839 = vsel %vm201, %v821, -inf
    %840 = vmax.xlane.f32.xlu0 %v839
    %v841 = vpop.xlane.xlu0 %840
    %v842 = vsel %vm201, %v822, -inf
    %843 = vmax.xlane.f32.xlu0 %v842
    %v844 = vpop.xlane.xlu0 %843
    %v845 = vsel %vm201, %v823, -inf
    %846 = vmax.xlane.f32.xlu0 %v845
    %v847 = vpop.xlane.xlu0 %846
    %v848 = vsub.f32 %v816, %v826
    %v849 = vsub.f32 %v817, %v829
    %v850 = vsub.f32 %v818, %v832
    %v851 = vsub.f32 %v819, %v835
    %v852 = vsub.f32 %v820, %v838
    %v853 = vsub.f32 %v821, %v841
    %v854 = vsub.f32 %v822, %v844
    %v855 = vsub.f32 %v823, %v847
    %v856 = vmul.f32 %v848, 1.442695
    %v857 = vpow.pop %v856
    %v858 = vmul.f32 %v849, 1.442695
    %v859 = vpow.pop %v858
    %v860 = vmul.f32 %v850, 1.442695
    %v861 = vpow.pop %v860
    %v862 = vmul.f32 %v851, 1.442695
    %v863 = vpow.pop %v862
    %v864 = vmul.f32 %v852, 1.442695
    %v865 = vpow.pop %v864
    %v866 = vmul.f32 %v853, 1.442695
    %v867 = vpow.pop %v866
    %v868 = vmul.f32 %v854, 1.442695
    %v869 = vpow.pop %v868
    %v870 = vmul.f32 %v855, 1.442695
    %v871 = vpow.pop %v870
    %v872 = vsel %vm201, %v857, 0.0
    %873 = vadd.xlane.f32.xlu0 %v872
    %v874 = vpop.xlane.xlu0 %873
    %v875 = vsel %vm201, %v859, 0.0
    %876 = vadd.xlane.f32.xlu0 %v875
    %v877 = vpop.xlane.xlu0 %876
    %v878 = vsel %vm201, %v861, 0.0
    %879 = vadd.xlane.f32.xlu0 %v878
    %v880 = vpop.xlane.xlu0 %879
    %v881 = vsel %vm201, %v863, 0.0
    %882 = vadd.xlane.f32.xlu0 %v881
    %v883 = vpop.xlane.xlu0 %882
    %v884 = vsel %vm201, %v865, 0.0
    %885 = vadd.xlane.f32.xlu0 %v884
    %v886 = vpop.xlane.xlu0 %885
    %v887 = vsel %vm201, %v867, 0.0
    %888 = vadd.xlane.f32.xlu0 %v887
    %v889 = vpop.xlane.xlu0 %888
    %v890 = vsel %vm201, %v869, 0.0
    %891 = vadd.xlane.f32.xlu0 %v890
    %v892 = vpop.xlane.xlu0 %891
    %v893 = vsel %vm201, %v871, 0.0
    %894 = vadd.xlane.f32.xlu0 %v893
    %v895 = vpop.xlane.xlu0 %894
    %v896 = vrcp.pop %v874
    %v897 = vrcp.pop %v877
    %v898 = vrcp.pop %v880
    %v899 = vrcp.pop %v883
    %v900 = vrcp.pop %v886
    %v901 = vrcp.pop %v889
    %v902 = vrcp.pop %v892
    %v903 = vrcp.pop %v895
    %v904 = vmul.f32 %v857, %v896
    %v905 = vmul.f32 %v859, %v897
    %v906 = vmul.f32 %v861, %v898
    %v907 = vmul.f32 %v863, %v899
    %v908 = vmul.f32 %v865, %v900
    %v909 = vmul.f32 %v867, %v901
    %v910 = vmul.f32 %v869, %v902
    %v911 = vmul.f32 %v871, %v903
    %912 = vrot.lane.b32.xlu0 %v171, 112
    %v913 = vpop.permute.xlu0 %912
    %v916 = vsel %vm201, %v904, 0
    %918 = vmatprep.subr.mxu0 0.0
    %919 = vmatpush1.msra.mxu0 %v913
    %920 = vmatprep.subr.mxu0 0.0
    %921 = vmatpush1.msra.mxu0 0.0
    %922 = vmatprep.subr.mxu0 0.0
    %923 = vmatpush1.msra.mxu0 0.0
    %924 = vmatprep.subr.mxu0 0.0
    %925 = vmatpush1.msra.mxu0 0.0
    %926 = vmatprep.subr.mxu0 0.0
    %927 = vmatpush1.msra.mxu0 0.0
    %928 = vmatprep.subr.mxu0 0.0
    %929 = vmatpush1.msra.mxu0 0.0
    %930 = vmatprep.subr.mxu0 0.0
    %931 = vmatpush1.msra.mxu0 0.0
    %932 = vmatprep.subr.mxu0 0.0
    %933 = vmatpush1.msra.mxu0 0.0
    %934 = vmatprep.subr.mxu0 0.0
    %935 = vmatpush1.msra.mxu0 0.0
    %936 = vmatprep.subr.mxu0 0.0
    %937 = vmatpush1.msra.mxu0 0.0
    %938 = vmatprep.subr.mxu0 0.0
    %939 = vmatpush1.msra.mxu0 0.0
    %940 = vmatprep.subr.mxu0 0.0
    %941 = vmatpush1.msra.mxu0 0.0
    %942 = vmatprep.subr.mxu0 0.0
    %943 = vmatpush1.msra.mxu0 0.0
    %944 = vmatprep.subr.mxu0 0.0
    %945 = vmatpush1.msra.mxu0 0.0
    %946 = vmatprep.subr.mxu0 0.0
    %947 = vmatpush1.msra.mxu0 0.0
    %948 = vmatprep.subr.mxu0 0.0
    %949 = vmatpush1.msra.mxu0 0.0
    %950 = vmatprep.subr.mxu0 0.0
    %951 = vmatpush1.msra.mxu0 0.0
    %952 = vmatprep.subr.mxu0 0.0
    %953 = vmatpush1.msra.mxu0 0.0
    %954 = vmatprep.subr.mxu0 0.0
    %955 = vmatpush1.msra.mxu0 0.0
    %956 = vmatprep.subr.mxu0 0.0
    %957 = vmatpush1.msra.mxu0 0.0
    %958 = vmatprep.subr.mxu0 0.0
    %959 = vmatpush1.msra.mxu0 0.0
    %960 = vmatprep.subr.mxu0 0.0
    %961 = vmatpush1.msra.mxu0 0.0
    %962 = vmatprep.subr.mxu0 0.0
    %963 = vmatpush1.msra.mxu0 0.0
    %964 = vmatprep.subr.mxu0 0.0
    %965 = vmatpush1.msra.mxu0 0.0
    %966 = vmatprep.subr.mxu0 0.0
    %967 = vmatpush1.msra.mxu0 0.0
    %968 = vmatprep.subr.mxu0 0.0
    %969 = vmatpush1.msra.mxu0 0.0
    %970 = vmatprep.subr.mxu0 0.0
    %971 = vmatpush1.msra.mxu0 0.0
    %972 = vmatprep.subr.mxu0 0.0
    %973 = vmatpush1.msra.mxu0 0.0
    %974 = vmatprep.subr.mxu0 0.0
    %975 = vmatpush1.msra.mxu0 0.0
    %976 = vmatprep.subr.mxu0 0.0
    %977 = vmatpush1.msra.mxu0 0.0
    %978 = vmatprep.subr.mxu0 0.0
    %979 = vmatpush1.msra.mxu0 0.0
    %980 = vmatprep.subr.mxu0 0.0
    %981 = vmatpush1.msra.mxu0 0.0
    %982 = vmatprep.mubr.f32.mxu0 0.0
    %983 = vmatmul.mubr.f32.gmra.mrb[0].mxu0 %v916
    %v984 = vpop.f32.mrb[0].mxu0
    %v985 = vadd.f32 0.0, %v984
    %v986 = vpop.f32.mrb[0].mxu0
    %987 = vdwg.mxu0
    %988 = vrot.lane.b32.xlu0 %v176, 112
    %v989 = vpop.permute.xlu0 %988
    %v992 = vsel %vm201, %v905, 0
    %994 = vmatprep.subr.mxu0 0.0
    %995 = vmatpush1.msra.mxu0 %v989
    %996 = vmatprep.subr.mxu0 0.0
    %997 = vmatpush1.msra.mxu0 0.0
    %998 = vmatprep.subr.mxu0 0.0
    %999 = vmatpush1.msra.mxu0 0.0
    %1000 = vmatprep.subr.mxu0 0.0
    %1001 = vmatpush1.msra.mxu0 0.0
    %1002 = vmatprep.subr.mxu0 0.0
    %1003 = vmatpush1.msra.mxu0 0.0
    %1004 = vmatprep.subr.mxu0 0.0
    %1005 = vmatpush1.msra.mxu0 0.0
    %1006 = vmatprep.subr.mxu0 0.0
    %1007 = vmatpush1.msra.mxu0 0.0
    %1008 = vmatprep.subr.mxu0 0.0
    %1009 = vmatpush1.msra.mxu0 0.0
    %1010 = vmatprep.subr.mxu0 0.0
    %1011 = vmatpush1.msra.mxu0 0.0
    %1012 = vmatprep.subr.mxu0 0.0
    %1013 = vmatpush1.msra.mxu0 0.0
    %1014 = vmatprep.subr.mxu0 0.0
    %1015 = vmatpush1.msra.mxu0 0.0
    %1016 = vmatprep.subr.mxu0 0.0
    %1017 = vmatpush1.msra.mxu0 0.0
    %1018 = vmatprep.subr.mxu0 0.0
    %1019 = vmatpush1.msra.mxu0 0.0
    %1020 = vmatprep.subr.mxu0 0.0
    %1021 = vmatpush1.msra.mxu0 0.0
    %1022 = vmatprep.subr.mxu0 0.0
    %1023 = vmatpush1.msra.mxu0 0.0
    %1024 = vmatprep.subr.mxu0 0.0
    %1025 = vmatpush1.msra.mxu0 0.0
    %1026 = vmatprep.subr.mxu0 0.0
    %1027 = vmatpush1.msra.mxu0 0.0
    %1028 = vmatprep.subr.mxu0 0.0
    %1029 = vmatpush1.msra.mxu0 0.0
    %1030 = vmatprep.subr.mxu0 0.0
    %1031 = vmatpush1.msra.mxu0 0.0
    %1032 = vmatprep.subr.mxu0 0.0
    %1033 = vmatpush1.msra.mxu0 0.0
    %1034 = vmatprep.subr.mxu0 0.0
    %1035 = vmatpush1.msra.mxu0 0.0
    %1036 = vmatprep.subr.mxu0 0.0
    %1037 = vmatpush1.msra.mxu0 0.0
    %1038 = vmatprep.subr.mxu0 0.0
    %1039 = vmatpush1.msra.mxu0 0.0
    %1040 = vmatprep.subr.mxu0 0.0
    %1041 = vmatpush1.msra.mxu0 0.0
    %1042 = vmatprep.subr.mxu0 0.0
    %1043 = vmatpush1.msra.mxu0 0.0
    %1044 = vmatprep.subr.mxu0 0.0
    %1045 = vmatpush1.msra.mxu0 0.0
    %1046 = vmatprep.subr.mxu0 0.0
    %1047 = vmatpush1.msra.mxu0 0.0
    %1048 = vmatprep.subr.mxu0 0.0
    %1049 = vmatpush1.msra.mxu0 0.0
    %1050 = vmatprep.subr.mxu0 0.0
    %1051 = vmatpush1.msra.mxu0 0.0
    %1052 = vmatprep.subr.mxu0 0.0
    %1053 = vmatpush1.msra.mxu0 0.0
    %1054 = vmatprep.subr.mxu0 0.0
    %1055 = vmatpush1.msra.mxu0 0.0
    %1056 = vmatprep.subr.mxu0 0.0
    %1057 = vmatpush1.msra.mxu0 0.0
    %1058 = vmatprep.mubr.f32.mxu0 0.0
    %1059 = vmatmul.mubr.f32.gmra.mrb[0].mxu0 %v992
    %v1060 = vpop.f32.mrb[0].mxu0
    %v1061 = vadd.f32 0.0, %v1060
    %v1062 = vpop.f32.mrb[0].mxu0
    %1063 = vdwg.mxu0
    %1064 = vrot.lane.b32.xlu0 %v182, 112
    %v1065 = vpop.permute.xlu0 %1064
    %v1068 = vsel %vm201, %v906, 0
    %1070 = vmatprep.subr.mxu0 0.0
    %1071 = vmatpush1.msra.mxu0 %v1065
    %1072 = vmatprep.subr.mxu0 0.0
    %1073 = vmatpush1.msra.mxu0 0.0
    %1074 = vmatprep.subr.mxu0 0.0
    %1075 = vmatpush1.msra.mxu0 0.0
    %1076 = vmatprep.subr.mxu0 0.0
    %1077 = vmatpush1.msra.mxu0 0.0
    %1078 = vmatprep.subr.mxu0 0.0
    %1079 = vmatpush1.msra.mxu0 0.0
    %1080 = vmatprep.subr.mxu0 0.0
    %1081 = vmatpush1.msra.mxu0 0.0
    %1082 = vmatprep.subr.mxu0 0.0
    %1083 = vmatpush1.msra.mxu0 0.0
    %1084 = vmatprep.subr.mxu0 0.0
    %1085 = vmatpush1.msra.mxu0 0.0
    %1086 = vmatprep.subr.mxu0 0.0
    %1087 = vmatpush1.msra.mxu0 0.0
    %1088 = vmatprep.subr.mxu0 0.0
    %1089 = vmatpush1.msra.mxu0 0.0
    %1090 = vmatprep.subr.mxu0 0.0
    %1091 = vmatpush1.msra.mxu0 0.0
    %1092 = vmatprep.subr.mxu0 0.0
    %1093 = vmatpush1.msra.mxu0 0.0
    %1094 = vmatprep.subr.mxu0 0.0
    %1095 = vmatpush1.msra.mxu0 0.0
    %1096 = vmatprep.subr.mxu0 0.0
    %1097 = vmatpush1.msra.mxu0 0.0
    %1098 = vmatprep.subr.mxu0 0.0
    %1099 = vmatpush1.msra.mxu0 0.0
    %1100 = vmatprep.subr.mxu0 0.0
    %1101 = vmatpush1.msra.mxu0 0.0
    %1102 = vmatprep.subr.mxu0 0.0
    %1103 = vmatpush1.msra.mxu0 0.0
    %1104 = vmatprep.subr.mxu0 0.0
    %1105 = vmatpush1.msra.mxu0 0.0
    %1106 = vmatprep.subr.mxu0 0.0
    %1107 = vmatpush1.msra.mxu0 0.0
    %1108 = vmatprep.subr.mxu0 0.0
    %1109 = vmatpush1.msra.mxu0 0.0
    %1110 = vmatprep.subr.mxu0 0.0
    %1111 = vmatpush1.msra.mxu0 0.0
    %1112 = vmatprep.subr.mxu0 0.0
    %1113 = vmatpush1.msra.mxu0 0.0
    %1114 = vmatprep.subr.mxu0 0.0
    %1115 = vmatpush1.msra.mxu0 0.0
    %1116 = vmatprep.subr.mxu0 0.0
    %1117 = vmatpush1.msra.mxu0 0.0
    %1118 = vmatprep.subr.mxu0 0.0
    %1119 = vmatpush1.msra.mxu0 0.0
    %1120 = vmatprep.subr.mxu0 0.0
    %1121 = vmatpush1.msra.mxu0 0.0
    %1122 = vmatprep.subr.mxu0 0.0
    %1123 = vmatpush1.msra.mxu0 0.0
    %1124 = vmatprep.subr.mxu0 0.0
    %1125 = vmatpush1.msra.mxu0 0.0
    %1126 = vmatprep.subr.mxu0 0.0
    %1127 = vmatpush1.msra.mxu0 0.0
    %1128 = vmatprep.subr.mxu0 0.0
    %1129 = vmatpush1.msra.mxu0 0.0
    %1130 = vmatprep.subr.mxu0 0.0
    %1131 = vmatpush1.msra.mxu0 0.0
    %1132 = vmatprep.subr.mxu0 0.0
    %1133 = vmatpush1.msra.mxu0 0.0
    %1134 = vmatprep.mubr.f32.mxu0 0.0
    %1135 = vmatmul.mubr.f32.gmra.mrb[0].mxu0 %v1068
    %v1136 = vpop.f32.mrb[0].mxu0
    %v1137 = vadd.f32 0.0, %v1136
    %v1138 = vpop.f32.mrb[0].mxu0
    %1139 = vdwg.mxu0
    %1140 = vrot.lane.b32.xlu0 %v184, 112
    %v1141 = vpop.permute.xlu0 %1140
    %v1144 = vsel %vm201, %v907, 0
    %1146 = vmatprep.subr.mxu0 0.0
    %1147 = vmatpush1.msra.mxu0 %v1141
    %1148 = vmatprep.subr.mxu0 0.0
    %1149 = vmatpush1.msra.mxu0 0.0
    %1150 = vmatprep.subr.mxu0 0.0
    %1151 = vmatpush1.msra.mxu0 0.0
    %1152 = vmatprep.subr.mxu0 0.0
    %1153 = vmatpush1.msra.mxu0 0.0
    %1154 = vmatprep.subr.mxu0 0.0
    %1155 = vmatpush1.msra.mxu0 0.0
    %1156 = vmatprep.subr.mxu0 0.0
    %1157 = vmatpush1.msra.mxu0 0.0
    %1158 = vmatprep.subr.mxu0 0.0
    %1159 = vmatpush1.msra.mxu0 0.0
    %1160 = vmatprep.subr.mxu0 0.0
    %1161 = vmatpush1.msra.mxu0 0.0
    %1162 = vmatprep.subr.mxu0 0.0
    %1163 = vmatpush1.msra.mxu0 0.0
    %1164 = vmatprep.subr.mxu0 0.0
    %1165 = vmatpush1.msra.mxu0 0.0
    %1166 = vmatprep.subr.mxu0 0.0
    %1167 = vmatpush1.msra.mxu0 0.0
    %1168 = vmatprep.subr.mxu0 0.0
    %1169 = vmatpush1.msra.mxu0 0.0
    %1170 = vmatprep.subr.mxu0 0.0
    %1171 = vmatpush1.msra.mxu0 0.0
    %1172 = vmatprep.subr.mxu0 0.0
    %1173 = vmatpush1.msra.mxu0 0.0
    %1174 = vmatprep.subr.mxu0 0.0
    %1175 = vmatpush1.msra.mxu0 0.0
    %1176 = vmatprep.subr.mxu0 0.0
    %1177 = vmatpush1.msra.mxu0 0.0
    %1178 = vmatprep.subr.mxu0 0.0
    %1179 = vmatpush1.msra.mxu0 0.0
    %1180 = vmatprep.subr.mxu0 0.0
    %1181 = vmatpush1.msra.mxu0 0.0
    %1182 = vmatprep.subr.mxu0 0.0
    %1183 = vmatpush1.msra.mxu0 0.0
    %1184 = vmatprep.subr.mxu0 0.0
    %1185 = vmatpush1.msra.mxu0 0.0
    %1186 = vmatprep.subr.mxu0 0.0
    %1187 = vmatpush1.msra.mxu0 0.0
    %1188 = vmatprep.subr.mxu0 0.0
    %1189 = vmatpush1.msra.mxu0 0.0
    %1190 = vmatprep.subr.mxu0 0.0
    %1191 = vmatpush1.msra.mxu0 0.0
    %1192 = vmatprep.subr.mxu0 0.0
    %1193 = vmatpush1.msra.mxu0 0.0
    %1194 = vmatprep.subr.mxu0 0.0
    %1195 = vmatpush1.msra.mxu0 0.0
    %1196 = vmatprep.subr.mxu0 0.0
    %1197 = vmatpush1.msra.mxu0 0.0
    %1198 = vmatprep.subr.mxu0 0.0
    %1199 = vmatpush1.msra.mxu0 0.0
    %1200 = vmatprep.subr.mxu0 0.0
    %1201 = vmatpush1.msra.mxu0 0.0
    %1202 = vmatprep.subr.mxu0 0.0
    %1203 = vmatpush1.msra.mxu0 0.0
    %1204 = vmatprep.subr.mxu0 0.0
    %1205 = vmatpush1.msra.mxu0 0.0
    %1206 = vmatprep.subr.mxu0 0.0
    %1207 = vmatpush1.msra.mxu0 0.0
    %1208 = vmatprep.subr.mxu0 0.0
    %1209 = vmatpush1.msra.mxu0 0.0
    %1210 = vmatprep.mubr.f32.mxu0 0.0
    %1211 = vmatmul.mubr.f32.gmra.mrb[0].mxu0 %v1144
    %v1212 = vpop.f32.mrb[0].mxu0
    %v1213 = vadd.f32 0.0, %v1212
    %v1214 = vpop.f32.mrb[0].mxu0
    %1215 = vdwg.mxu0
    %1216 = vrot.lane.b32.xlu0 %v186, 112
    %v1217 = vpop.permute.xlu0 %1216
    %v1220 = vsel %vm201, %v908, 0
    %1222 = vmatprep.subr.mxu0 0.0
    %1223 = vmatpush1.msra.mxu0 %v1217
    %1224 = vmatprep.subr.mxu0 0.0
    %1225 = vmatpush1.msra.mxu0 0.0
    %1226 = vmatprep.subr.mxu0 0.0
    %1227 = vmatpush1.msra.mxu0 0.0
    %1228 = vmatprep.subr.mxu0 0.0
    %1229 = vmatpush1.msra.mxu0 0.0
    %1230 = vmatprep.subr.mxu0 0.0
    %1231 = vmatpush1.msra.mxu0 0.0
    %1232 = vmatprep.subr.mxu0 0.0
    %1233 = vmatpush1.msra.mxu0 0.0
    %1234 = vmatprep.subr.mxu0 0.0
    %1235 = vmatpush1.msra.mxu0 0.0
    %1236 = vmatprep.subr.mxu0 0.0
    %1237 = vmatpush1.msra.mxu0 0.0
    %1238 = vmatprep.subr.mxu0 0.0
    %1239 = vmatpush1.msra.mxu0 0.0
    %1240 = vmatprep.subr.mxu0 0.0
    %1241 = vmatpush1.msra.mxu0 0.0
    %1242 = vmatprep.subr.mxu0 0.0
    %1243 = vmatpush1.msra.mxu0 0.0
    %1244 = vmatprep.subr.mxu0 0.0
    %1245 = vmatpush1.msra.mxu0 0.0
    %1246 = vmatprep.subr.mxu0 0.0
    %1247 = vmatpush1.msra.mxu0 0.0
    %1248 = vmatprep.subr.mxu0 0.0
    %1249 = vmatpush1.msra.mxu0 0.0
    %1250 = vmatprep.subr.mxu0 0.0
    %1251 = vmatpush1.msra.mxu0 0.0
    %1252 = vmatprep.subr.mxu0 0.0
    %1253 = vmatpush1.msra.mxu0 0.0
    %1254 = vmatprep.subr.mxu0 0.0
    %1255 = vmatpush1.msra.mxu0 0.0
    %1256 = vmatprep.subr.mxu0 0.0
    %1257 = vmatpush1.msra.mxu0 0.0
    %1258 = vmatprep.subr.mxu0 0.0
    %1259 = vmatpush1.msra.mxu0 0.0
    %1260 = vmatprep.subr.mxu0 0.0
    %1261 = vmatpush1.msra.mxu0 0.0
    %1262 = vmatprep.subr.mxu0 0.0
    %1263 = vmatpush1.msra.mxu0 0.0
    %1264 = vmatprep.subr.mxu0 0.0
    %1265 = vmatpush1.msra.mxu0 0.0
    %1266 = vmatprep.subr.mxu0 0.0
    %1267 = vmatpush1.msra.mxu0 0.0
    %1268 = vmatprep.subr.mxu0 0.0
    %1269 = vmatpush1.msra.mxu0 0.0
    %1270 = vmatprep.subr.mxu0 0.0
    %1271 = vmatpush1.msra.mxu0 0.0
    %1272 = vmatprep.subr.mxu0 0.0
    %1273 = vmatpush1.msra.mxu0 0.0
    %1274 = vmatprep.subr.mxu0 0.0
    %1275 = vmatpush1.msra.mxu0 0.0
    %1276 = vmatprep.subr.mxu0 0.0
    %1277 = vmatpush1.msra.mxu0 0.0
    %1278 = vmatprep.subr.mxu0 0.0
    %1279 = vmatpush1.msra.mxu0 0.0
    %1280 = vmatprep.subr.mxu0 0.0
    %1281 = vmatpush1.msra.mxu0 0.0
    %1282 = vmatprep.subr.mxu0 0.0
    %1283 = vmatpush1.msra.mxu0 0.0
    %1284 = vmatprep.subr.mxu0 0.0
    %1285 = vmatpush1.msra.mxu0 0.0
    %1286 = vmatprep.mubr.f32.mxu0 0.0
    %1287 = vmatmul.mubr.f32.gmra.mrb[0].mxu0 %v1220
    %v1288 = vpop.f32.mrb[0].mxu0
    %v1289 = vadd.f32 0.0, %v1288
    %v1290 = vpop.f32.mrb[0].mxu0
    %1291 = vdwg.mxu0
    %1292 = vrot.lane.b32.xlu0 %v188, 112
    %v1293 = vpop.permute.xlu0 %1292
    %v1296 = vsel %vm201, %v909, 0
    %1298 = vmatprep.subr.mxu0 0.0
    %1299 = vmatpush1.msra.mxu0 %v1293
    %1300 = vmatprep.subr.mxu0 0.0
    %1301 = vmatpush1.msra.mxu0 0.0
    %1302 = vmatprep.subr.mxu0 0.0
    %1303 = vmatpush1.msra.mxu0 0.0
    %1304 = vmatprep.subr.mxu0 0.0
    %1305 = vmatpush1.msra.mxu0 0.0
    %1306 = vmatprep.subr.mxu0 0.0
    %1307 = vmatpush1.msra.mxu0 0.0
    %1308 = vmatprep.subr.mxu0 0.0
    %1309 = vmatpush1.msra.mxu0 0.0
    %1310 = vmatprep.subr.mxu0 0.0
    %1311 = vmatpush1.msra.mxu0 0.0
    %1312 = vmatprep.subr.mxu0 0.0
    %1313 = vmatpush1.msra.mxu0 0.0
    %1314 = vmatprep.subr.mxu0 0.0
    %1315 = vmatpush1.msra.mxu0 0.0
    %1316 = vmatprep.subr.mxu0 0.0
    %1317 = vmatpush1.msra.mxu0 0.0
    %1318 = vmatprep.subr.mxu0 0.0
    %1319 = vmatpush1.msra.mxu0 0.0
    %1320 = vmatprep.subr.mxu0 0.0
    %1321 = vmatpush1.msra.mxu0 0.0
    %1322 = vmatprep.subr.mxu0 0.0
    %1323 = vmatpush1.msra.mxu0 0.0
    %1324 = vmatprep.subr.mxu0 0.0
    %1325 = vmatpush1.msra.mxu0 0.0
    %1326 = vmatprep.subr.mxu0 0.0
    %1327 = vmatpush1.msra.mxu0 0.0
    %1328 = vmatprep.subr.mxu0 0.0
    %1329 = vmatpush1.msra.mxu0 0.0
    %1330 = vmatprep.subr.mxu0 0.0
    %1331 = vmatpush1.msra.mxu0 0.0
    %1332 = vmatprep.subr.mxu0 0.0
    %1333 = vmatpush1.msra.mxu0 0.0
    %1334 = vmatprep.subr.mxu0 0.0
    %1335 = vmatpush1.msra.mxu0 0.0
    %1336 = vmatprep.subr.mxu0 0.0
    %1337 = vmatpush1.msra.mxu0 0.0
    %1338 = vmatprep.subr.mxu0 0.0
    %1339 = vmatpush1.msra.mxu0 0.0
    %1340 = vmatprep.subr.mxu0 0.0
    %1341 = vmatpush1.msra.mxu0 0.0
    %1342 = vmatprep.subr.mxu0 0.0
    %1343 = vmatpush1.msra.mxu0 0.0
    %1344 = vmatprep.subr.mxu0 0.0
    %1345 = vmatpush1.msra.mxu0 0.0
    %1346 = vmatprep.subr.mxu0 0.0
    %1347 = vmatpush1.msra.mxu0 0.0
    %1348 = vmatprep.subr.mxu0 0.0
    %1349 = vmatpush1.msra.mxu0 0.0
    %1350 = vmatprep.subr.mxu0 0.0
    %1351 = vmatpush1.msra.mxu0 0.0
    %1352 = vmatprep.subr.mxu0 0.0
    %1353 = vmatpush1.msra.mxu0 0.0
    %1354 = vmatprep.subr.mxu0 0.0
    %1355 = vmatpush1.msra.mxu0 0.0
    %1356 = vmatprep.subr.mxu0 0.0
    %1357 = vmatpush1.msra.mxu0 0.0
    %1358 = vmatprep.subr.mxu0 0.0
    %1359 = vmatpush1.msra.mxu0 0.0
    %1360 = vmatprep.subr.mxu0 0.0
    %1361 = vmatpush1.msra.mxu0 0.0
    %1362 = vmatprep.mubr.f32.mxu0 0.0
    %1363 = vmatmul.mubr.f32.gmra.mrb[0].mxu0 %v1296
    %v1364 = vpop.f32.mrb[0].mxu0
    %v1365 = vadd.f32 0.0, %v1364
    %v1366 = vpop.f32.mrb[0].mxu0
    %1367 = vdwg.mxu0
    %1368 = vrot.lane.b32.xlu0 %v190, 112
    %v1369 = vpop.permute.xlu0 %1368
    %v1372 = vsel %vm201, %v910, 0
    %1374 = vmatprep.subr.mxu0 0.0
    %1375 = vmatpush1.msra.mxu0 %v1369
    %1376 = vmatprep.subr.mxu0 0.0
    %1377 = vmatpush1.msra.mxu0 0.0
    %1378 = vmatprep.subr.mxu0 0.0
    %1379 = vmatpush1.msra.mxu0 0.0
    %1380 = vmatprep.subr.mxu0 0.0
    %1381 = vmatpush1.msra.mxu0 0.0
    %1382 = vmatprep.subr.mxu0 0.0
    %1383 = vmatpush1.msra.mxu0 0.0
    %1384 = vmatprep.subr.mxu0 0.0
    %1385 = vmatpush1.msra.mxu0 0.0
    %1386 = vmatprep.subr.mxu0 0.0
    %1387 = vmatpush1.msra.mxu0 0.0
    %1388 = vmatprep.subr.mxu0 0.0
    %1389 = vmatpush1.msra.mxu0 0.0
    %1390 = vmatprep.subr.mxu0 0.0
    %1391 = vmatpush1.msra.mxu0 0.0
    %1392 = vmatprep.subr.mxu0 0.0
    %1393 = vmatpush1.msra.mxu0 0.0
    %1394 = vmatprep.subr.mxu0 0.0
    %1395 = vmatpush1.msra.mxu0 0.0
    %1396 = vmatprep.subr.mxu0 0.0
    %1397 = vmatpush1.msra.mxu0 0.0
    %1398 = vmatprep.subr.mxu0 0.0
    %1399 = vmatpush1.msra.mxu0 0.0
    %1400 = vmatprep.subr.mxu0 0.0
    %1401 = vmatpush1.msra.mxu0 0.0
    %1402 = vmatprep.subr.mxu0 0.0
    %1403 = vmatpush1.msra.mxu0 0.0
    %1404 = vmatprep.subr.mxu0 0.0
    %1405 = vmatpush1.msra.mxu0 0.0
    %1406 = vmatprep.subr.mxu0 0.0
    %1407 = vmatpush1.msra.mxu0 0.0
    %1408 = vmatprep.subr.mxu0 0.0
    %1409 = vmatpush1.msra.mxu0 0.0
    %1410 = vmatprep.subr.mxu0 0.0
    %1411 = vmatpush1.msra.mxu0 0.0
    %1412 = vmatprep.subr.mxu0 0.0
    %1413 = vmatpush1.msra.mxu0 0.0
    %1414 = vmatprep.subr.mxu0 0.0
    %1415 = vmatpush1.msra.mxu0 0.0
    %1416 = vmatprep.subr.mxu0 0.0
    %1417 = vmatpush1.msra.mxu0 0.0
    %1418 = vmatprep.subr.mxu0 0.0
    %1419 = vmatpush1.msra.mxu0 0.0
    %1420 = vmatprep.subr.mxu0 0.0
    %1421 = vmatpush1.msra.mxu0 0.0
    %1422 = vmatprep.subr.mxu0 0.0
    %1423 = vmatpush1.msra.mxu0 0.0
    %1424 = vmatprep.subr.mxu0 0.0
    %1425 = vmatpush1.msra.mxu0 0.0
    %1426 = vmatprep.subr.mxu0 0.0
    %1427 = vmatpush1.msra.mxu0 0.0
    %1428 = vmatprep.subr.mxu0 0.0
    %1429 = vmatpush1.msra.mxu0 0.0
    %1430 = vmatprep.subr.mxu0 0.0
    %1431 = vmatpush1.msra.mxu0 0.0
    %1432 = vmatprep.subr.mxu0 0.0
    %1433 = vmatpush1.msra.mxu0 0.0
    %1434 = vmatprep.subr.mxu0 0.0
    %1435 = vmatpush1.msra.mxu0 0.0
    %1436 = vmatprep.subr.mxu0 0.0
    %1437 = vmatpush1.msra.mxu0 0.0
    %1438 = vmatprep.mubr.f32.mxu0 0.0
    %1439 = vmatmul.mubr.f32.gmra.mrb[0].mxu0 %v1372
    %v1440 = vpop.f32.mrb[0].mxu0
    %v1441 = vadd.f32 0.0, %v1440
    %v1442 = vpop.f32.mrb[0].mxu0
    %1443 = vdwg.mxu0
    %1444 = vrot.lane.b32.xlu0 %v192, 112
    %v1445 = vpop.permute.xlu0 %1444
    %v1448 = vsel %vm201, %v911, 0
    %1450 = vmatprep.subr.mxu0 0.0
    %1451 = vmatpush1.msra.mxu0 %v1445
    %1452 = vmatprep.subr.mxu0 0.0
    %1453 = vmatpush1.msra.mxu0 0.0
    %1454 = vmatprep.subr.mxu0 0.0
    %1455 = vmatpush1.msra.mxu0 0.0
    %1456 = vmatprep.subr.mxu0 0.0
    %1457 = vmatpush1.msra.mxu0 0.0
    %1458 = vmatprep.subr.mxu0 0.0
    %1459 = vmatpush1.msra.mxu0 0.0
    %1460 = vmatprep.subr.mxu0 0.0
    %1461 = vmatpush1.msra.mxu0 0.0
    %1462 = vmatprep.subr.mxu0 0.0
    %1463 = vmatpush1.msra.mxu0 0.0
    %1464 = vmatprep.subr.mxu0 0.0
    %1465 = vmatpush1.msra.mxu0 0.0
    %1466 = vmatprep.subr.mxu0 0.0
    %1467 = vmatpush1.msra.mxu0 0.0
    %1468 = vmatprep.subr.mxu0 0.0
    %1469 = vmatpush1.msra.mxu0 0.0
    %1470 = vmatprep.subr.mxu0 0.0
    %1471 = vmatpush1.msra.mxu0 0.0
    %1472 = vmatprep.subr.mxu0 0.0
    %1473 = vmatpush1.msra.mxu0 0.0
    %1474 = vmatprep.subr.mxu0 0.0
    %1475 = vmatpush1.msra.mxu0 0.0
    %1476 = vmatprep.subr.mxu0 0.0
    %1477 = vmatpush1.msra.mxu0 0.0
    %1478 = vmatprep.subr.mxu0 0.0
    %1479 = vmatpush1.msra.mxu0 0.0
    %1480 = vmatprep.subr.mxu0 0.0
    %1481 = vmatpush1.msra.mxu0 0.0
    %1482 = vmatprep.subr.mxu0 0.0
    %1483 = vmatpush1.msra.mxu0 0.0
    %1484 = vmatprep.subr.mxu0 0.0
    %1485 = vmatpush1.msra.mxu0 0.0
    %1486 = vmatprep.subr.mxu0 0.0
    %1487 = vmatpush1.msra.mxu0 0.0
    %1488 = vmatprep.subr.mxu0 0.0
    %1489 = vmatpush1.msra.mxu0 0.0
    %1490 = vmatprep.subr.mxu0 0.0
    %1491 = vmatpush1.msra.mxu0 0.0
    %1492 = vmatprep.subr.mxu0 0.0
    %1493 = vmatpush1.msra.mxu0 0.0
    %1494 = vmatprep.subr.mxu0 0.0
    %1495 = vmatpush1.msra.mxu0 0.0
    %1496 = vmatprep.subr.mxu0 0.0
    %1497 = vmatpush1.msra.mxu0 0.0
    %1498 = vmatprep.subr.mxu0 0.0
    %1499 = vmatpush1.msra.mxu0 0.0
    %1500 = vmatprep.subr.mxu0 0.0
    %1501 = vmatpush1.msra.mxu0 0.0
    %1502 = vmatprep.subr.mxu0 0.0
    %1503 = vmatpush1.msra.mxu0 0.0
    %1504 = vmatprep.subr.mxu0 0.0
    %1505 = vmatpush1.msra.mxu0 0.0
    %1506 = vmatprep.subr.mxu0 0.0
    %1507 = vmatpush1.msra.mxu0 0.0
    %1508 = vmatprep.subr.mxu0 0.0
    %1509 = vmatpush1.msra.mxu0 0.0
    %1510 = vmatprep.subr.mxu0 0.0
    %1511 = vmatpush1.msra.mxu0 0.0
    %1512 = vmatprep.subr.mxu0 0.0
    %1513 = vmatpush1.msra.mxu0 0.0
    %1514 = vmatprep.mubr.f32.mxu0 0.0
    %1515 = vmatmul.mubr.f32.gmra.mrb[0].mxu0 %v1448
    %v1516 = vpop.f32.mrb[0].mxu0
    %v1517 = vadd.f32 0.0, %v1516
    %v1518 = vpop.f32.mrb[0].mxu0
    %1519 = vdwg.mxu0
    %1522 = vrot.lane.b32.xlu0 %v1137, 8
    %v1523 = vpop.permute.xlu0 %1522
    %1524 = vrot.lane.b32.xlu0 %v1213, 8
    %v1525 = vpop.permute.xlu0 %1524
    %1530 = vrot.lane.b32.xlu0 %v1289, 16
    %v1531 = vpop.permute.xlu0 %1530
    %1532 = vrot.lane.b32.xlu0 %v1365, 16
    %v1533 = vpop.permute.xlu0 %1532
    %1538 = vrot.lane.b32.xlu0 %v1441, 24
    %v1539 = vpop.permute.xlu0 %1538
    %1540 = vrot.lane.b32.xlu0 %v1517, 24
    %v1541 = vpop.permute.xlu0 %1540
    %v1544 = vsel %vm201, %v985, %v1523
    %v1545 = vsel %vm201, %v1061, %v1525
    %vm1546 = vcmask 130048
    %v1547 = vsel %vm1546, %v1544, %v1531
    %v1548 = vsel %vm1546, %v1545, %v1533
    %vm1549 = vcmask 195584
    %v1550 = vsel %vm1549, %v1547, %v1539
    %v1551 = vsel %vm1549, %v1548, %v1541
    %v1552 = vlaneseq
    %v1553 = vshrl.u32 %v1552, 7
    %v1554 = vsub.s32 0, %v1553
    %v1555 = vrot.slane %v26, %v1554
    %v1557 = vsel %vm40, %v1550, 0
    %v1560 = vsel %vm40, %v1551, 0
    %1562 = vmatprep.subr.mxu0 0.0
    %1563 = vmatpush1.msra.mxu0 %v36
    %1564 = vmatprep.subr.mxu0 0.0
    %1565 = vmatpush1.msra.mxu0 %v37
    %1566 = vmatprep.subr.mxu0 0.0
    %1567 = vmatpush1.msra.mxu0 %v38
    %1568 = vmatprep.subr.mxu0 0.0
    %1569 = vmatpush1.msra.mxu0 %v39
    %1570 = vmatprep.subr.mxu0 0.0
    %1571 = vmatpush1.msra.mxu0 0.0
    %1572 = vmatprep.subr.mxu0 0.0
    %1573 = vmatpush1.msra.mxu0 0.0
    %1574 = vmatprep.subr.mxu0 0.0
    %1575 = vmatpush1.msra.mxu0 0.0
    %1576 = vmatprep.subr.mxu0 0.0
    %1577 = vmatpush1.msra.mxu0 0.0
    %1578 = vmatprep.subr.mxu0 0.0
    %1579 = vmatpush1.msra.mxu0 0.0
    %1580 = vmatprep.subr.mxu0 0.0
    %1581 = vmatpush1.msra.mxu0 0.0
    %1582 = vmatprep.subr.mxu0 0.0
    %1583 = vmatpush1.msra.mxu0 0.0
    %1584 = vmatprep.subr.mxu0 0.0
    %1585 = vmatpush1.msra.mxu0 0.0
    %1586 = vmatprep.subr.mxu0 0.0
    %1587 = vmatpush1.msra.mxu0 0.0
    %1588 = vmatprep.subr.mxu0 0.0
    %1589 = vmatpush1.msra.mxu0 0.0
    %1590 = vmatprep.subr.mxu0 0.0
    %1591 = vmatpush1.msra.mxu0 0.0
    %1592 = vmatprep.subr.mxu0 0.0
    %1593 = vmatpush1.msra.mxu0 0.0
    %1594 = vmatprep.subr.mxu0 0.0
    %1595 = vmatpush1.msra.mxu0 0.0
    %1596 = vmatprep.subr.mxu0 0.0
    %1597 = vmatpush1.msra.mxu0 0.0
    %1598 = vmatprep.subr.mxu0 0.0
    %1599 = vmatpush1.msra.mxu0 0.0
    %1600 = vmatprep.subr.mxu0 0.0
    %1601 = vmatpush1.msra.mxu0 0.0
    %1602 = vmatprep.subr.mxu0 0.0
    %1603 = vmatpush1.msra.mxu0 0.0
    %1604 = vmatprep.subr.mxu0 0.0
    %1605 = vmatpush1.msra.mxu0 0.0
    %1606 = vmatprep.subr.mxu0 0.0
    %1607 = vmatpush1.msra.mxu0 0.0
    %1608 = vmatprep.subr.mxu0 0.0
    %1609 = vmatpush1.msra.mxu0 0.0
    %1610 = vmatprep.subr.mxu0 0.0
    %1611 = vmatpush1.msra.mxu0 0.0
    %1612 = vmatprep.subr.mxu0 0.0
    %1613 = vmatpush1.msra.mxu0 0.0
    %1614 = vmatprep.subr.mxu0 0.0
    %1615 = vmatpush1.msra.mxu0 0.0
    %1616 = vmatprep.subr.mxu0 0.0
    %1617 = vmatpush1.msra.mxu0 0.0
    %1618 = vmatprep.subr.mxu0 0.0
    %1619 = vmatpush1.msra.mxu0 0.0
    %1620 = vmatprep.subr.mxu0 0.0
    %1621 = vmatpush1.msra.mxu0 0.0
    %1622 = vmatprep.subr.mxu0 0.0
    %1623 = vmatpush1.msra.mxu0 0.0
    %1624 = vmatprep.subr.mxu0 0.0
    %1625 = vmatpush1.msra.mxu0 0.0
    %1626 = vmatprep.mubr.f32.mxu0 0.0
    %1627 = vmatmul.mubr.f32.gmra.mrb[0].mxu0 %v1557
    %v1628 = vpop.f32.mrb[0].mxu0
    %v1629 = vadd.f32 %v1555, %v1628
    %v1630 = vpop.f32.mrb[0].mxu0
    %1631 = vmatprep.mubr.f32.mxu0 0.0
    %1632 = vmatmul.mubr.f32.gmra.mrb[0].mxu0 %v1560
    %v1633 = vpop.f32.mrb[0].mxu0
    %v1634 = vadd.f32 %v1555, %v1633
    %v1635 = vpop.f32.mrb[0].mxu0
    %1636 = vdwg.mxu0
    %v1637 = vadd.f32 %v1629, %v18
    %v1638 = vadd.f32 %v1634, %v19
    %v1639 = vsel %vm40, %v1637, 0.0
    %1640 = vadd.xlane.f32.xlu0 %v1639
    %v1641 = vpop.xlane.xlu0 %1640
    %v1642 = vsel %vm40, %v1638, 0.0
    %1643 = vadd.xlane.f32.xlu0 %v1642
    %v1644 = vpop.xlane.xlu0 %1643
    %v1645 = vmul.f32 %v1641, %v47
    %v1646 = vmul.f32 %v1644, %v47
    %v1647 = vsub.f32 %v1637, %v1645
    %v1648 = vsub.f32 %v1638, %v1646
    %v1649 = vmul.f32 %v1647, %v1647
    %v1650 = vmul.f32 %v1648, %v1648
    %v1651 = vsel %vm40, %v1649, 0.0
    %1652 = vadd.xlane.f32.xlu0 %v1651
    %v1653 = vpop.xlane.xlu0 %1652
    %v1654 = vsel %vm40, %v1650, 0.0
    %1655 = vadd.xlane.f32.xlu0 %v1654
    %v1656 = vpop.xlane.xlu0 %1655
    %v1657 = vmul.f32 %v1653, %v47
    %v1658 = vmul.f32 %v1656, %v47
    %v1659 = vrsqrt.pop %v1657
    %v1660 = vmul.f32 %v1657, %v1659
    %vm1661 = vcmp.eq.f32.partialorder %v1657, inf
    %v1662 = vsel %vm1661, %v1657, %v1660
    %vm1663 = vcmp.eq.f32.partialorder %v1657, 0.0
    %v1664 = vand.u32 %v1657, 2147483648
    %v1665 = vsel %vm1663, %v1664, %v1662
    %v1666 = vrsqrt.pop %v1658
    %v1667 = vmul.f32 %v1658, %v1666
    %vm1668 = vcmp.eq.f32.partialorder %v1658, inf
    %v1669 = vsel %vm1668, %v1658, %v1667
    %vm1670 = vcmp.eq.f32.partialorder %v1658, 0.0
    %v1671 = vand.u32 %v1658, 2147483648
    %v1672 = vsel %vm1670, %v1671, %v1669
    %v1673 = vadd.f32 %v1665, 1e-05
    %v1674 = vadd.f32 %v1672, 1e-05
    %v1675 = vrcp.pop %v1673
    %v1676 = vmul.f32 %v1647, %v1675
    %v1677 = vrcp.pop %v1674
    %v1678 = vmul.f32 %v1648, %v1677
    %v1679 = vlaneseq
    %v1680 = vshrl.u32 %v1679, 7
    %v1681 = vsub.s32 0, %v1680
    %v1682 = vrot.slane %v22, %v1681
    %v1683 = vmul.f32 %v1682, %v1676
    %v1684 = vmul.f32 %v1682, %v1678
    %v1685 = vlaneseq
    %v1686 = vshrl.u32 %v1685, 7
    %v1687 = vsub.s32 0, %v1686
    %v1688 = vrot.slane %v23, %v1687
    %v1689 = vadd.f32 %v1683, %v1688
    %v1690 = vadd.f32 %v1684, %v1688
    %v1691 = vlaneseq
    %v1692 = vshrl.u32 %v1691, 7
    %v1693 = vsub.s32 0, %v1692
    %v1694 = vrot.slane %v25, %v1693
    %v1696 = vsel %vm40, %v1689, 0
    %v1699 = vsel %vm40, %v1690, 0
    %1701 = vmatprep.subr.mxu0 0.0
    %1702 = vmatpush1.msra.mxu0 %v32
    %1703 = vmatprep.subr.mxu0 0.0
    %1704 = vmatpush1.msra.mxu0 %v33
    %1705 = vmatprep.subr.mxu0 0.0
    %1706 = vmatpush1.msra.mxu0 %v34
    %1707 = vmatprep.subr.mxu0 0.0
    %1708 = vmatpush1.msra.mxu0 %v35
    %1709 = vmatprep.subr.mxu0 0.0
    %1710 = vmatpush1.msra.mxu0 0.0
    %1711 = vmatprep.subr.mxu0 0.0
    %1712 = vmatpush1.msra.mxu0 0.0
    %1713 = vmatprep.subr.mxu0 0.0
    %1714 = vmatpush1.msra.mxu0 0.0
    %1715 = vmatprep.subr.mxu0 0.0
    %1716 = vmatpush1.msra.mxu0 0.0
    %1717 = vmatprep.subr.mxu0 0.0
    %1718 = vmatpush1.msra.mxu0 0.0
    %1719 = vmatprep.subr.mxu0 0.0
    %1720 = vmatpush1.msra.mxu0 0.0
    %1721 = vmatprep.subr.mxu0 0.0
    %1722 = vmatpush1.msra.mxu0 0.0
    %1723 = vmatprep.subr.mxu0 0.0
    %1724 = vmatpush1.msra.mxu0 0.0
    %1725 = vmatprep.subr.mxu0 0.0
    %1726 = vmatpush1.msra.mxu0 0.0
    %1727 = vmatprep.subr.mxu0 0.0
    %1728 = vmatpush1.msra.mxu0 0.0
    %1729 = vmatprep.subr.mxu0 0.0
    %1730 = vmatpush1.msra.mxu0 0.0
    %1731 = vmatprep.subr.mxu0 0.0
    %1732 = vmatpush1.msra.mxu0 0.0
    %1733 = vmatprep.subr.mxu0 0.0
    %1734 = vmatpush1.msra.mxu0 0.0
    %1735 = vmatprep.subr.mxu0 0.0
    %1736 = vmatpush1.msra.mxu0 0.0
    %1737 = vmatprep.subr.mxu0 0.0
    %1738 = vmatpush1.msra.mxu0 0.0
    %1739 = vmatprep.subr.mxu0 0.0
    %1740 = vmatpush1.msra.mxu0 0.0
    %1741 = vmatprep.subr.mxu0 0.0
    %1742 = vmatpush1.msra.mxu0 0.0
    %1743 = vmatprep.subr.mxu0 0.0
    %1744 = vmatpush1.msra.mxu0 0.0
    %1745 = vmatprep.subr.mxu0 0.0
    %1746 = vmatpush1.msra.mxu0 0.0
    %1747 = vmatprep.subr.mxu0 0.0
    %1748 = vmatpush1.msra.mxu0 0.0
    %1749 = vmatprep.subr.mxu0 0.0
    %1750 = vmatpush1.msra.mxu0 0.0
    %1751 = vmatprep.subr.mxu0 0.0
    %1752 = vmatpush1.msra.mxu0 0.0
    %1753 = vmatprep.subr.mxu0 0.0
    %1754 = vmatpush1.msra.mxu0 0.0
    %1755 = vmatprep.subr.mxu0 0.0
    %1756 = vmatpush1.msra.mxu0 0.0
    %1757 = vmatprep.subr.mxu0 0.0
    %1758 = vmatpush1.msra.mxu0 0.0
    %1759 = vmatprep.subr.mxu0 0.0
    %1760 = vmatpush1.msra.mxu0 0.0
    %1761 = vmatprep.subr.mxu0 0.0
    %1762 = vmatpush1.msra.mxu0 0.0
    %1763 = vmatprep.subr.mxu0 0.0
    %1764 = vmatpush1.msra.mxu0 0.0
    %1765 = vmatprep.mubr.f32.mxu0 0.0
    %1766 = vmatmul.mubr.f32.gmra.mrb[0].mxu0 %v1696
    %v1767 = vpop.f32.mrb[0].mxu0
    %v1768 = vadd.f32 %v1694, %v1767
    %v1769 = vpop.f32.mrb[0].mxu0
    %1770 = vmatprep.mubr.f32.mxu0 0.0
    %1771 = vmatmul.mubr.f32.gmra.mrb[0].mxu0 %v1699
    %v1772 = vpop.f32.mrb[0].mxu0
    %v1773 = vadd.f32 %v1694, %v1772
    %v1774 = vpop.f32.mrb[0].mxu0
    %1775 = vdwg.mxu0
    %v1776 = vmul.f32 %v1768, 0.5
    %v1777 = vmul.f32 %v1773, 0.5
    %v1778 = vmul.f32 %v1768, 0.70710677
    %v1779 = vmul.f32 %v1773, 0.70710677
    %v1780 = verf.f32.pop %v1778
    %v1781 = verf.f32.pop %v1779
    %v1782 = vadd.f32 %v1780, 1.0
    %v1783 = vadd.f32 %v1781, 1.0
    %v1784 = vmul.f32 %v1776, %v1782
    %v1785 = vmul.f32 %v1777, %v1783
    %v1786 = vld [vmem:[%s2] sm:$0xff]
    %v1787 = vld [vmem:[%s2 + $0x8] sm:$0xff]
    %v1788 = vld [vmem:[%s2 + $0x10] sm:$0xff]
    %v1789 = vld [vmem:[%s2 + $0x18] sm:$0xff]
    %v1790 = vld [vmem:[%s2 + $0x20] sm:$0xff]
    %v1791 = vld [vmem:[%s2 + $0x28] sm:$0xff]
    %v1792 = vld [vmem:[%s2 + $0x30] sm:$0xff]
    %v1793 = vld [vmem:[%s2 + $0x38] sm:$0xff]
    %v1794 = vld [vmem:[%s2 + $0x40] sm:$0xff]
    %v1795 = vld [vmem:[%s2 + $0x48] sm:$0xff]
    %v1796 = vld [vmem:[%s2 + $0x50] sm:$0xff]
    %v1797 = vld [vmem:[%s2 + $0x58] sm:$0xff]
    %v1798 = vld [vmem:[%s2 + $0x60] sm:$0xff]
    %v1799 = vld [vmem:[%s2 + $0x68] sm:$0xff]
    %v1800 = vld [vmem:[%s2 + $0x70] sm:$0xff]
    %v1801 = vld [vmem:[%s2 + $0x78] sm:$0xff]
    %v1802 = vlaneseq
    %v1803 = vshrl.u32 %v1802, 7
    %v1804 = vsub.s32 0, %v1803
    %v1805 = vrot.slane %v27, %v1804
    %1806 = vmatprep.subr.mxu0 0.0
    %1807 = vmatpush1.msra.mxu0 %v1786
    %1808 = vmatprep.subr.mxu0 0.0
    %1809 = vmatpush1.msra.mxu0 %v1787
    %1810 = vmatprep.subr.mxu0 0.0
    %1811 = vmatpush1.msra.mxu0 %v1788
    %1812 = vmatprep.subr.mxu0 0.0
    %1813 = vmatpush1.msra.mxu0 %v1789
    %1814 = vmatprep.subr.mxu0 0.0
    %1815 = vmatpush1.msra.mxu0 %v1790
    %1816 = vmatprep.subr.mxu0 0.0
    %1817 = vmatpush1.msra.mxu0 %v1791
    %1818 = vmatprep.subr.mxu0 0.0
    %1819 = vmatpush1.msra.mxu0 %v1792
    %1820 = vmatprep.subr.mxu0 0.0
    %1821 = vmatpush1.msra.mxu0 %v1793
    %1822 = vmatprep.subr.mxu0 0.0
    %1823 = vmatpush1.msra.mxu0 %v1794
    %1824 = vmatprep.subr.mxu0 0.0
    %1825 = vmatpush1.msra.mxu0 %v1795
    %1826 = vmatprep.subr.mxu0 0.0
    %1827 = vmatpush1.msra.mxu0 %v1796
    %1828 = vmatprep.subr.mxu0 0.0
    %1829 = vmatpush1.msra.mxu0 %v1797
    %1830 = vmatprep.subr.mxu0 0.0
    %1831 = vmatpush1.msra.mxu0 %v1798
    %1832 = vmatprep.subr.mxu0 0.0
    %1833 = vmatpush1.msra.mxu0 %v1799
    %1834 = vmatprep.subr.mxu0 0.0
    %1835 = vmatpush1.msra.mxu0 %v1800
    %1836 = vmatprep.subr.mxu0 0.0
    %1837 = vmatpush1.msra.mxu0 %v1801
    %1838 = vmatprep.subr.mxu0 0.0
    %1839 = vmatpush1.msra.mxu0 0.0
    %1840 = vmatprep.subr.mxu0 0.0
    %1841 = vmatpush1.msra.mxu0 0.0
    %1842 = vmatprep.subr.mxu0 0.0
    %1843 = vmatpush1.msra.mxu0 0.0
    %1844 = vmatprep.subr.mxu0 0.0
    %1845 = vmatpush1.msra.mxu0 0.0
    %1846 = vmatprep.subr.mxu0 0.0
    %1847 = vmatpush1.msra.mxu0 0.0
    %1848 = vmatprep.subr.mxu0 0.0
    %1849 = vmatpush1.msra.mxu0 0.0
    %1850 = vmatprep.subr.mxu0 0.0
    %1851 = vmatpush1.msra.mxu0 0.0
    %1852 = vmatprep.subr.mxu0 0.0
    %1853 = vmatpush1.msra.mxu0 0.0
    %1854 = vmatprep.subr.mxu0 0.0
    %1855 = vmatpush1.msra.mxu0 0.0
    %1856 = vmatprep.subr.mxu0 0.0
    %1857 = vmatpush1.msra.mxu0 0.0
    %1858 = vmatprep.subr.mxu0 0.0
    %1859 = vmatpush1.msra.mxu0 0.0
    %1860 = vmatprep.subr.mxu0 0.0
    %1861 = vmatpush1.msra.mxu0 0.0
    %1862 = vmatprep.subr.mxu0 0.0
    %1863 = vmatpush1.msra.mxu0 0.0
    %1864 = vmatprep.subr.mxu0 0.0
    %1865 = vmatpush1.msra.mxu0 0.0
    %1866 = vmatprep.subr.mxu0 0.0
    %1867 = vmatpush1.msra.mxu0 0.0
    %1868 = vmatprep.subr.mxu0 0.0
    %1869 = vmatpush1.msra.mxu0 0.0
    %1870 = vmatprep.mubr.f32.mxu0 0.0
    %1871 = vmatmul.mubr.f32.gmra.mrb[0].mxu0 %v1784
    %v1872 = vpop.f32.mrb[0].mxu0
    %v1873 = vadd.f32 %v1805, %v1872
    %v1874 = vpop.f32.mrb[0].mxu0
    %1875 = vmatprep.mubr.f32.mxu0 0.0
    %1876 = vmatmul.mubr.f32.gmra.mrb[0].mxu0 %v1785
    %v1877 = vpop.f32.mrb[0].mxu0
    %v1878 = vadd.f32 %v1805, %v1877
    %v1879 = vpop.f32.mrb[0].mxu0
    %1880 = vdwg.mxu0
    %v1881 = vadd.f32 %v1873, %v1637
    %v1882 = vadd.f32 %v1878, %v1638
    %1883 = vst.msk [vmem:[#allocation2] sm:$0xff] %vm40, %v1881
    %1884 = vst.msk [vmem:[#allocation2 + $0x8] sm:$0xff] %vm40, %v1882
    // Predicated region
    $region18: #{tpu_custom_call.1} parent=1 // pred_check
      _
    $region19: #{tpu_custom_call.1} parent=1 // pred_check_branch
      %1886 = sbr.rel (0) target = $region21
    $region20: #{tpu_custom_call.1} parent=1 // pred_region
      %s1888 = ssub.s32 256, 256
      %1889 = vsyncadd [#allocation3], %s1888
      %s1890 = sshll.u32 [#allocation2], 4
      %s1891 = int_to_ptr.vmem [resolvable:$true] %s1890
      %1896 = dma.vmem_to_hbm [thread:$0]  %s1891, 256, %s4, [#allocation3], 128, 128, 8
    $region21: #{tpu_custom_call.1} parent=1 // pred_fallthru
      _
    // Predicated region
    $region22: #{tpu_custom_call.1} parent=1 // pred_check
      _
    $region23: #{tpu_custom_call.1} parent=1 // pred_check_branch
      %1898 = sbr.rel (0) target = $region25
    $region24: #{tpu_custom_call.1} parent=1 // pred_region
      %1899 = dma.done [#allocation3], 256
    $region25: #{tpu_custom_call.1} parent=1 // pred_fallthru
      _
    %1900 = vsyncpa [#allocation3], 1

</llo_original>
